<compile_context>
chip_gen: v7x
topology: tpu7x:2x2x1
jax: 0.10.0
libtpu: 0.0.40
codegen_flags: <defaults>
</compile_context>

<pallas_src>
import functools

import jax
import jax.numpy as jnp
from jax.experimental import pallas as pl
from jax.experimental.pallas import tpu as pltpu


# ------------------------------ Pallas kernel --------------------------------

def _sepconv_kernel(xp_ref, dw_ref, pw_ref, o_ref, *, K, Ho, Wo):
    """Fused depthwise KxK (stride 1) + pointwise 1x1 conv for one batch image.

    xp_ref: (1, Hp, Wp, Cin) f32  zero-padded input tile (Hp = Ho + K - 1).
    dw_ref: (K*K, Cin)       f32  depthwise taps (tap-major, channels on lanes).
    pw_ref: (Cin, Cout)      bf16 pointwise weights.
    o_ref : (1, Ho*Wo, Cout) f32  lane-dense output slab.
    """
    xp = xp_ref[0]                       # (Hp, Wp, Cin) f32
    cin = xp.shape[-1]

    # Depthwise MAC in f32; the K*K shifted views are taken in-register.
    acc = jnp.zeros((Ho, Wo, cin), jnp.float32)
    for kh in range(K):
        for kw in range(K):
            tap = xp[kh:kh + Ho, kw:kw + Wo, :]                       # (Ho, Wo, Cin)
            w_tap = dw_ref[kh * K + kw:kh * K + kw + 1, :].reshape(1, 1, cin)
            acc = acc + tap * w_tap

    # Pointwise 1x1 conv as an MXU matmul: bf16 operands, f32 accumulate.
    y = jnp.dot(acc.reshape(Ho * Wo, cin).astype(jnp.bfloat16),
                pw_ref[...],
                preferred_element_type=jnp.float32)
    o_ref[0] = y.astype(o_ref.dtype)


# --------------------------------- wrapper -----------------------------------

def separable_conv2d(x_nchw, dw_w, pw_w, *, kernel_size=3, padding=1):
    """SeparableConv2d forward (stride=1, dilation=1, bias=False).

    x_nchw: (B, Cin, H, W)        input (PyTorch NCHW layout)
    dw_w  : (Cin, 1, K, K)        depthwise conv weight (PyTorch layout)
    pw_w  : (Cout, Cin, 1, 1)     pointwise conv weight (PyTorch layout)
    returns (B, Cout, Ho, Wo)     NCHW output
    """
    # TODO(synk): stride>1 / dilation>1 / bias=True variants are not
    # implemented (Xception always uses stride=1, dilation=1, bias=False).
    K = int(kernel_size)
    B, Cin, H, W = x_nchw.shape
    Cout = pw_w.shape[0]
    Ho = H + 2 * padding - K + 1
    Wo = W + 2 * padding - K + 1

    # NCHW -> NHWC (channels on the lane axis); pad the halo once in XLA.
    x = jnp.transpose(x_nchw, (0, 2, 3, 1)).astype(jnp.float32)
    if padding:
        x = jnp.pad(x, ((0, 0), (padding, padding), (padding, padding), (0, 0)))
    Hp, Wp = x.shape[1], x.shape[2]

    # Weight re-layout: depthwise (K*K, Cin) f32, pointwise (Cin, Cout) bf16.
    dw = jnp.transpose(dw_w.reshape(Cin, K * K), (1, 0)).astype(jnp.float32)
    pw = jnp.transpose(pw_w.reshape(Cout, Cin), (1, 0)).astype(jnp.bfloat16)

    flops = 2.0 * B * Ho * Wo * (K * K * Cin + Cin * Cout)
    bytes_accessed = (4.0 * B * Hp * Wp * Cin + 4.0 * B * Ho * Wo * Cout
                      + 4.0 * K * K * Cin + 2.0 * Cin * Cout)

    out = pl.pallas_call(
        functools.partial(_sepconv_kernel, K=K, Ho=Ho, Wo=Wo),
        grid=(B,),
        in_specs=[
            pl.BlockSpec((1, Hp, Wp, Cin), lambda b: (b, 0, 0, 0)),
            pl.BlockSpec((K * K, Cin), lambda b: (0, 0)),
            pl.BlockSpec((Cin, Cout), lambda b: (0, 0)),
        ],
        out_specs=pl.BlockSpec((1, Ho * Wo, Cout), lambda b: (b, 0, 0)),
        out_shape=jax.ShapeDtypeStruct((B, Ho * Wo, Cout), jnp.float32),
        compiler_params=pltpu.CompilerParams(dimension_semantics=("parallel",)),
        cost_estimate=pl.CostEstimate(flops=int(flops), transcendentals=0,
                                      bytes_accessed=int(bytes_accessed)),
    )(x, dw, pw)

    # (B, Ho*Wo, Cout) -> NCHW
    return jnp.transpose(out.reshape(B, Ho, Wo, Cout), (0, 3, 1, 2))


# ------------------------------ pure-JAX reference ---------------------------

def _reference_separable_conv2d(x_nchw, dw_w, pw_w, *, kernel_size, padding):
    Cin = x_nchw.shape[1]
    dn = jax.lax.conv_dimension_numbers(x_nchw.shape, dw_w.shape,
                                        ("NCHW", "OIHW", "NCHW"))
    y = jax.lax.conv_general_dilated(
        x_nchw, dw_w, window_strides=(1, 1),
        padding=((padding, padding), (padding, padding)),
        dimension_numbers=dn, feature_group_count=Cin)
    dn2 = jax.lax.conv_dimension_numbers(y.shape, pw_w.shape,
                                         ("NCHW", "OIHW", "NCHW"))
    return jax.lax.conv_general_dilated(
        y, pw_w, window_strides=(1, 1), padding="VALID", dimension_numbers=dn2)


def _check(out, ref):
    err = float(jnp.max(jnp.abs(out - ref)))
    tol = 2e-2 * float(jnp.max(jnp.abs(ref))) + 1e-2   # bf16-operand matmul tolerance
    assert bool(jnp.all(jnp.isfinite(out)))
    assert err < tol, (err, tol)


# ----------------------------------- main -------------------------------------

if __name__ == "__main__":
    key = jax.random.PRNGKey(0)
    k1, k2, k3, k4, k5 = jax.random.split(key, 5)

    B, Cin, H, W, Cout, K, P = 2, 32, 16, 16, 64, 3, 1
    x = jax.random.normal(k1, (B, Cin, H, W), jnp.float32)

    # Xception-style usage: 3x3 depthwise (pad 1) + 1x1 pointwise, bias=False.
    dw_w = jax.random.normal(k2, (Cin, 1, K, K), jnp.float32) / float(K * K)
    pw_w = jax.random.normal(k3, (Cout, Cin, 1, 1), jnp.float32) / jnp.sqrt(float(Cin))

    fwd = jax.jit(functools.partial(separable_conv2d, kernel_size=K, padding=P))
    out = jax.block_until_ready(fwd(x, dw_w, pw_w))
    assert out.shape == (B, Cout, H, W), out.shape
    _check(out, _reference_separable_conv2d(x, dw_w, pw_w, kernel_size=K, padding=P))

    # Module-default configuration: kernel_size=1, padding=0.
    dw1 = jax.random.normal(k4, (Cin, 1, 1, 1), jnp.float32)
    pw1 = jax.random.normal(k5, (Cout, Cin, 1, 1), jnp.float32) / jnp.sqrt(float(Cin))
    fwd1 = jax.jit(functools.partial(separable_conv2d, kernel_size=1, padding=0))
    out1 = jax.block_until_ready(fwd1(x, dw1, pw1))
    assert out1.shape == (B, Cout, H, W), out1.shape
    _check(out1, _reference_separable_conv2d(x, dw1, pw1, kernel_size=1, padding=0))

    print("KERNEL_OK")
</pallas_src>

<mosaic_0001>
module attributes {stable_mosaic.version = 11 : i64} {
  func.func @_sepconv_kernel(%arg0: i32, %arg1: memref<1x18x18x32xf32, #tpu.memory_space<vmem>>, %arg2: memref<9x32xf32, #tpu.memory_space<vmem>>, %arg3: memref<32x64xbf16, #tpu.memory_space<vmem>>, %arg4: memref<1x256x64xf32, #tpu.memory_space<vmem>>) attributes {dimension_semantics = [#tpu.dimension_semantics<parallel>], iteration_bounds = array<i64: 2>, scalar_prefetch = 0 : i64, scratch_operands = 0 : i64, tpu.core_type = #tpu.core_type<tc>, window_params = [{transform_indices = @transform_0, window_bounds = array<i64: 1, 18, 18, 32>}, {pipeline_mode = #tpu.pipeline_mode<synchronous>, transform_indices = @transform_1, window_bounds = array<i64: 9, 32>}, {pipeline_mode = #tpu.pipeline_mode<synchronous>, transform_indices = @transform_2, window_bounds = array<i64: 32, 64>}, {transform_indices = @transform_3, window_bounds = array<i64: 1, 256, 64>}]} {
    %c0 = arith.constant 0 : index
    %c0_0 = arith.constant 0 : index
    %c0_1 = arith.constant 0 : index
    %c0_2 = arith.constant 0 : index
    %0 = vector.load %arg1[%c0, %c0_0, %c0_1, %c0_2] : memref<1x18x18x32xf32, #tpu.memory_space<vmem>>, vector<1x18x18x32xf32>
    %1 = vector.shape_cast %0 : vector<1x18x18x32xf32> to vector<18x18x32xf32>
    %cst = arith.constant 0.000000e+00 : f32
    %2 = vector.broadcast %cst : f32 to vector<16x16x32xf32>
    %3 = vector.extract_strided_slice %1 {offsets = [0, 0, 0], sizes = [16, 16, 32], strides = [1, 1, 1]} : vector<18x18x32xf32> to vector<16x16x32xf32>
    %c0_3 = arith.constant 0 : index
    %c0_4 = arith.constant 0 : index
    %4 = vector.load %arg2[%c0_3, %c0_4] : memref<9x32xf32, #tpu.memory_space<vmem>>, vector<1x32xf32>
    %5 = vector.shape_cast %4 : vector<1x32xf32> to vector<1x1x32xf32>
    %6 = vector.broadcast %5 : vector<1x1x32xf32> to vector<16x16x32xf32>
    %7 = arith.mulf %3, %6 : vector<16x16x32xf32>
    %8 = arith.addf %2, %7 : vector<16x16x32xf32>
    %9 = vector.extract_strided_slice %1 {offsets = [0, 1, 0], sizes = [16, 16, 32], strides = [1, 1, 1]} : vector<18x18x32xf32> to vector<16x16x32xf32>
    %c1 = arith.constant 1 : index
    %c0_5 = arith.constant 0 : index
    %10 = vector.load %arg2[%c1, %c0_5] : memref<9x32xf32, #tpu.memory_space<vmem>>, vector<1x32xf32>
    %11 = vector.shape_cast %10 : vector<1x32xf32> to vector<1x1x32xf32>
    %12 = vector.broadcast %11 : vector<1x1x32xf32> to vector<16x16x32xf32>
    %13 = arith.mulf %9, %12 : vector<16x16x32xf32>
    %14 = arith.addf %8, %13 : vector<16x16x32xf32>
    %15 = vector.extract_strided_slice %1 {offsets = [0, 2, 0], sizes = [16, 16, 32], strides = [1, 1, 1]} : vector<18x18x32xf32> to vector<16x16x32xf32>
    %c2 = arith.constant 2 : index
    %c0_6 = arith.constant 0 : index
    %16 = vector.load %arg2[%c2, %c0_6] : memref<9x32xf32, #tpu.memory_space<vmem>>, vector<1x32xf32>
    %17 = vector.shape_cast %16 : vector<1x32xf32> to vector<1x1x32xf32>
    %18 = vector.broadcast %17 : vector<1x1x32xf32> to vector<16x16x32xf32>
    %19 = arith.mulf %15, %18 : vector<16x16x32xf32>
    %20 = arith.addf %14, %19 : vector<16x16x32xf32>
    %21 = vector.extract_strided_slice %1 {offsets = [1, 0, 0], sizes = [16, 16, 32], strides = [1, 1, 1]} : vector<18x18x32xf32> to vector<16x16x32xf32>
    %c3 = arith.constant 3 : index
    %c0_7 = arith.constant 0 : index
    %22 = vector.load %arg2[%c3, %c0_7] : memref<9x32xf32, #tpu.memory_space<vmem>>, vector<1x32xf32>
    %23 = vector.shape_cast %22 : vector<1x32xf32> to vector<1x1x32xf32>
    %24 = vector.broadcast %23 : vector<1x1x32xf32> to vector<16x16x32xf32>
    %25 = arith.mulf %21, %24 : vector<16x16x32xf32>
    %26 = arith.addf %20, %25 : vector<16x16x32xf32>
    %27 = vector.extract_strided_slice %1 {offsets = [1, 1, 0], sizes = [16, 16, 32], strides = [1, 1, 1]} : vector<18x18x32xf32> to vector<16x16x32xf32>
    %c4 = arith.constant 4 : index
    %c0_8 = arith.constant 0 : index
    %28 = vector.load %arg2[%c4, %c0_8] : memref<9x32xf32, #tpu.memory_space<vmem>>, vector<1x32xf32>
    %29 = vector.shape_cast %28 : vector<1x32xf32> to vector<1x1x32xf32>
    %30 = vector.broadcast %29 : vector<1x1x32xf32> to vector<16x16x32xf32>
    %31 = arith.mulf %27, %30 : vector<16x16x32xf32>
    %32 = arith.addf %26, %31 : vector<16x16x32xf32>
    %33 = vector.extract_strided_slice %1 {offsets = [1, 2, 0], sizes = [16, 16, 32], strides = [1, 1, 1]} : vector<18x18x32xf32> to vector<16x16x32xf32>
    %c5 = arith.constant 5 : index
    %c0_9 = arith.constant 0 : index
    %34 = vector.load %arg2[%c5, %c0_9] : memref<9x32xf32, #tpu.memory_space<vmem>>, vector<1x32xf32>
    %35 = vector.shape_cast %34 : vector<1x32xf32> to vector<1x1x32xf32>
    %36 = vector.broadcast %35 : vector<1x1x32xf32> to vector<16x16x32xf32>
    %37 = arith.mulf %33, %36 : vector<16x16x32xf32>
    %38 = arith.addf %32, %37 : vector<16x16x32xf32>
    %39 = vector.extract_strided_slice %1 {offsets = [2, 0, 0], sizes = [16, 16, 32], strides = [1, 1, 1]} : vector<18x18x32xf32> to vector<16x16x32xf32>
    %c6 = arith.constant 6 : index
    %c0_10 = arith.constant 0 : index
    %40 = vector.load %arg2[%c6, %c0_10] : memref<9x32xf32, #tpu.memory_space<vmem>>, vector<1x32xf32>
    %41 = vector.shape_cast %40 : vector<1x32xf32> to vector<1x1x32xf32>
    %42 = vector.broadcast %41 : vector<1x1x32xf32> to vector<16x16x32xf32>
    %43 = arith.mulf %39, %42 : vector<16x16x32xf32>
    %44 = arith.addf %38, %43 : vector<16x16x32xf32>
    %45 = vector.extract_strided_slice %1 {offsets = [2, 1, 0], sizes = [16, 16, 32], strides = [1, 1, 1]} : vector<18x18x32xf32> to vector<16x16x32xf32>
    %c7 = arith.constant 7 : index
    %c0_11 = arith.constant 0 : index
    %46 = vector.load %arg2[%c7, %c0_11] : memref<9x32xf32, #tpu.memory_space<vmem>>, vector<1x32xf32>
    %47 = vector.shape_cast %46 : vector<1x32xf32> to vector<1x1x32xf32>
    %48 = vector.broadcast %47 : vector<1x1x32xf32> to vector<16x16x32xf32>
    %49 = arith.mulf %45, %48 : vector<16x16x32xf32>
    %50 = arith.addf %44, %49 : vector<16x16x32xf32>
    %51 = vector.extract_strided_slice %1 {offsets = [2, 2, 0], sizes = [16, 16, 32], strides = [1, 1, 1]} : vector<18x18x32xf32> to vector<16x16x32xf32>
    %c8 = arith.constant 8 : index
    %c0_12 = arith.constant 0 : index
    %52 = vector.load %arg2[%c8, %c0_12] : memref<9x32xf32, #tpu.memory_space<vmem>>, vector<1x32xf32>
    %53 = vector.shape_cast %52 : vector<1x32xf32> to vector<1x1x32xf32>
    %54 = vector.broadcast %53 : vector<1x1x32xf32> to vector<16x16x32xf32>
    %55 = arith.mulf %51, %54 : vector<16x16x32xf32>
    %56 = arith.addf %50, %55 : vector<16x16x32xf32>
    %57 = vector.shape_cast %56 : vector<16x16x32xf32> to vector<256x32xf32>
    %58 = arith.truncf %57 : vector<256x32xf32> to vector<256x32xbf16>
    %c0_13 = arith.constant 0 : index
    %c0_14 = arith.constant 0 : index
    %59 = vector.load %arg3[%c0_13, %c0_14] : memref<32x64xbf16, #tpu.memory_space<vmem>>, vector<32x64xbf16>
    %cst_15 = arith.constant dense<0.000000e+00> : vector<256x64xf32>
    %60 = tpu.matmul %58, %59, %cst_15 {dimension_numbers = #tpu.dot_dimension_numbers<[1], [0], [0], [1], [0, 0, 1, 1], [], []>} : vector<256x32xbf16>, vector<32x64xbf16>, vector<256x64xf32> -> vector<256x64xf32>
    %c0_16 = arith.constant 0 : index
    %c0_17 = arith.constant 0 : index
    %c0_18 = arith.constant 0 : index
    %61 = vector.load %arg4[%c0_16, %c0_17, %c0_18] : memref<1x256x64xf32, #tpu.memory_space<vmem>>, vector<1x256x64xf32>
    %62 = vector.shape_cast %61 : vector<1x256x64xf32> to vector<256x64xf32>
    %63 = vector.shape_cast %60 : vector<256x64xf32> to vector<1x256x64xf32>
    tpu.vector_store %arg4[%c0_16, %c0_17, %c0_18], %63 {strides = array<i32>} : memref<1x256x64xf32, #tpu.memory_space<vmem>>, vector<1x256x64xf32>,
    return
  }
  func.func @transform_0(%arg0: i32) -> (i32, i32, i32, i32) {
    %c0_i32 = arith.constant 0 : i32
    %c0_i32_0 = arith.constant 0 : i32
    %c0_i32_1 = arith.constant 0 : i32
    %c0_i32_2 = arith.constant 0 : i32
    return %arg0, %c0_i32, %c0_i32_0, %c0_i32_1 : i32, i32, i32, i32
  }
  func.func @transform_1(%arg0: i32) -> (i32, i32) {
    %c0_i32 = arith.constant 0 : i32
    %c0_i32_0 = arith.constant 0 : i32
    %c0_i32_1 = arith.constant 0 : i32
    return %c0_i32, %c0_i32_0 : i32, i32
  }
  func.func @transform_2(%arg0: i32) -> (i32, i32) {
    %c0_i32 = arith.constant 0 : i32
    %c0_i32_0 = arith.constant 0 : i32
    %c0_i32_1 = arith.constant 0 : i32
    return %c0_i32, %c0_i32_0 : i32, i32
  }
  func.func @transform_3(%arg0: i32) -> (i32, i32, i32) {
    %c0_i32 = arith.constant 0 : i32
    %c0_i32_0 = arith.constant 0 : i32
    %c0_i32_1 = arith.constant 0 : i32
    return %arg0, %c0_i32, %c0_i32_0 : i32, i32, i32
  }
}

</mosaic_0001>

<llo_original>
// kernel: separable_conv2d.1
$region0: #{separable_conv2d.1}
  #allocation0 [shape = 'u32[]', space=smem, size = 0x4, offset = 0x4, fixed_abs, tag = 'smem constant byte address 0x4 - core index']
  #allocation1 [shape = 'u32[144,128]{1,0:T(1,128)}', space=vmem, size = 0x12000, scoped, tag = 'internal scratch']
  %s0 = inlined_call_operand.vmem [shape: f32[2,18,18,32], index: 0, kind: input, shape index: {}]
  %s1 = inlined_call_operand.vmem [shape: f32[9,32], index: 1, kind: input, shape index: {}]
  %s2 = inlined_call_operand.vmem [shape: bf16[32,64], index: 2, kind: input, shape index: {}]
  %s3 = inlined_call_operand.hbm [shape: f32[2,256,64], index: 3, kind: output, shape index: {}]
  %s4 = sld [smem:[#allocation0]]
  $region45: #{separable_conv2d.1} parent=0
    _
  %s6 = ssub.s32 1, %s4
  %s7 = scalar_select 0, %s6, %s4
  $region1: #{separable_conv2d.1} parent=0
    #allocation2 [shape = 'u8[262144]{0}', space=vmem, size = 0x40000, scoped, tag = 'output window, operand 0']
    #allocation3 [shape = 's32[2]{0}', space=sflag, size = 0x8, scoped, tag = 'scoped memory for separable_conv2d.1']
    %8 = vsyncpa [#allocation3], 0
    %s9 = scalar_lea.sflag [#allocation3], 1
    %10 = vsyncpa %s9, 0
    loop: start=0, step=1, limit=4
    $region2: #{separable_conv2d.1} parent=1 // loop_pre_header
      _
    $region3: #{separable_conv2d.1} parent=1 // loop_header
      %s12 = sphi 0, %s16
      %p13 = scmp.ge.s32.totalorder %s12, 4
      %s22 = sphi 0, %s24
      %s25 = sphi 0, %s22
      %s26 = sphi 0, %s25
      %s42 = sphi 0, %s26
      %s46 = sphi 0, %s46
      %s48 = sphi 0, %s46
      %s49 = sphi 0, %s48
      %s63 = sphi 0, %s49
      %s67 = sphi 0, %s67
      %s69 = sphi 0, %s67
      %s70 = sphi 0, %s69
      %s84 = sphi 0, %s70
      %s90 = sphi 0, %s92
      %s93 = sphi 0, %s90
      %s94 = sphi 0, %s93
      %s110 = sphi 0, %s94
    $region4: #{separable_conv2d.1} parent=1 // loop_header_branch
      %15 = sbr.rel (%p13) target = $region8
    $region5: #{separable_conv2d.1} parent=1 // loop_body
      %s17 = ssub.s32 %s12, 1
      %s18 = ssub.s32 %s12, 2
      %s19 = sadd.s32 %s12, 1
      %s20 = ssub.s32 %s12, %s19
      %p21 = scmp.eq.s32.totalorder %s20, 0
      %s23 = sadd.s32 %s22, 1
      %s24 = scalar_select %p21, %s22, %s23
      %p27 = pneg %p21
      %p28 = scmp.eq.s32.totalorder %s12, 1
      %p29 = por %p27, %p28
      %p30 = scmp.ne.s32.totalorder %s22, %s25
      %p31 = scmp.eq.s32.totalorder %s12, 0
      %p32 = por %p30, %p31
      %p33 = scmp.ne.s32.totalorder %s22, %s25
      %p34 = scmp.eq.s32.totalorder %s17, 1
      %p35 = por %p33, %p34
      %p36 = scmp.ne.s32.totalorder %s25, %s26
      %p37 = scmp.eq.s32.totalorder %s17, 0
      %p38 = por %p36, %p37
      %p39 = scmp.ne.s32.totalorder %s25, %s26
      %p40 = scmp.eq.s32.totalorder %s18, 1
      %p41 = por %p39, %p40
      %p43 = scmp.ne.s32.totalorder %s26, %s42
      %p44 = scmp.eq.s32.totalorder %s18, 0
      %p45 = por %p43, %p44
      %s47 = sadd.s32 %s46, 1
      %p50 = scmp.eq.s32.totalorder %s12, 1
      %p51 = scmp.ne.s32.totalorder %s46, %s48
      %p52 = scmp.eq.s32.totalorder %s12, 0
      %p53 = por %p51, %p52
      %p54 = scmp.ne.s32.totalorder %s46, %s48
      %p55 = scmp.eq.s32.totalorder %s17, 1
      %p56 = por %p54, %p55
      %p57 = scmp.ne.s32.totalorder %s48, %s49
      %p58 = scmp.eq.s32.totalorder %s17, 0
      %p59 = por %p57, %p58
      %p60 = scmp.ne.s32.totalorder %s48, %s49
      %p61 = scmp.eq.s32.totalorder %s18, 1
      %p62 = por %p60, %p61
      %p64 = scmp.ne.s32.totalorder %s49, %s63
      %p65 = scmp.eq.s32.totalorder %s18, 0
      %p66 = por %p64, %p65
      %s68 = sadd.s32 %s67, 1
      %p71 = scmp.eq.s32.totalorder %s12, 1
      %p72 = scmp.ne.s32.totalorder %s67, %s69
      %p73 = scmp.eq.s32.totalorder %s12, 0
      %p74 = por %p72, %p73
      %p75 = scmp.ne.s32.totalorder %s67, %s69
      %p76 = scmp.eq.s32.totalorder %s17, 1
      %p77 = por %p75, %p76
      %p78 = scmp.ne.s32.totalorder %s69, %s70
      %p79 = scmp.eq.s32.totalorder %s17, 0
      %p80 = por %p78, %p79
      %p81 = scmp.ne.s32.totalorder %s69, %s70
      %p82 = scmp.eq.s32.totalorder %s18, 1
      %p83 = por %p81, %p82
      %p85 = scmp.ne.s32.totalorder %s70, %s84
      %p86 = scmp.eq.s32.totalorder %s18, 0
      %p87 = por %p85, %p86
      %s88 = ssub.s32 %s12, %s19
      %p89 = scmp.eq.s32.totalorder %s88, 0
      %s91 = sadd.s32 %s90, 1
      %s92 = scalar_select %p89, %s90, %s91
      %p95 = pneg %p89
      %p96 = scmp.eq.s32.totalorder %s12, 1
      %p97 = por %p95, %p96
      %p98 = scmp.ne.s32.totalorder %s90, %s93
      %p99 = scmp.eq.s32.totalorder %s12, 0
      %p100 = por %p98, %p99
      %p101 = scmp.ne.s32.totalorder %s90, %s93
      %p102 = scmp.eq.s32.totalorder %s17, 1
      %p103 = por %p101, %p102
      %p104 = scmp.ne.s32.totalorder %s93, %s94
      %p105 = scmp.eq.s32.totalorder %s17, 0
      %p106 = por %p104, %p105
      %p107 = scmp.ne.s32.totalorder %s93, %s94
      %p108 = scmp.eq.s32.totalorder %s18, 1
      %p109 = por %p107, %p108
      %p111 = scmp.ne.s32.totalorder %s94, %s110
      %p112 = scmp.eq.s32.totalorder %s18, 0
      %p113 = por %p111, %p112
      %p114 = scmp.le.s32.totalorder 1, %s12
      %p115 = scmp.lt.s32.totalorder %s12, 3
      %p116 = pnand %p114, %p115
      %p117 = pneg %p116
      // Predicated region
      $region9: #{separable_conv2d.1} parent=5 // pred_check
        _
      $region10: #{separable_conv2d.1} parent=5 // pred_check_branch
        %119 = sbr.rel (%p116) target = $region12
      $region11: #{separable_conv2d.1} parent=5 // pred_region
        %s120 = ssub.s32 %s12, 1
        // Predicated region
        $region13: #{separable_conv2d.1} parent=11 // pred_check
          %p121 = pneg %p59
        $region14: #{separable_conv2d.1} parent=11 // pred_check_branch
          %123 = sbr.rel (%p121) target = $region16
        $region15: #{separable_conv2d.1} parent=11 // pred_region
          _
        $region16: #{separable_conv2d.1} parent=11 // pred_fallthru
          _
        // Predicated region
        $region17: #{separable_conv2d.1} parent=11 // pred_check
          %p124 = pneg %p80
        $region18: #{separable_conv2d.1} parent=11 // pred_check_branch
          %126 = sbr.rel (%p124) target = $region20
        $region19: #{separable_conv2d.1} parent=11 // pred_region
          _
        $region20: #{separable_conv2d.1} parent=11 // pred_fallthru
          _
      $region12: #{separable_conv2d.1} parent=5 // pred_fallthru
        _
      %p127 = scmp.lt.s32.totalorder %s12, 2
      // Predicated region
      $region21: #{separable_conv2d.1} parent=5 // pred_check
        %p128 = pneg %p127
      $region22: #{separable_conv2d.1} parent=5 // pred_check_branch
        %130 = sbr.rel (%p128) target = $region24
      $region23: #{separable_conv2d.1} parent=5 // pred_region
        // Predicated region
        $region25: #{separable_conv2d.1} parent=23 // pred_check
          %p131 = pneg %p32
        $region26: #{separable_conv2d.1} parent=23 // pred_check_branch
          %133 = sbr.rel (%p131) target = $region28
        $region27: #{separable_conv2d.1} parent=23 // pred_region
          %p134 = scmp.lt.s32.totalorder %s12, 1
          %s135 = scalar_select %p134, %s12, 1
          %s136 = smul.addr %s135, 54
          %s137 = smul.addr %s136, 8
          %s138 = scalar_lea.vmem %s0, %s137
        $region28: #{separable_conv2d.1} parent=23 // pred_fallthru
          _
      $region24: #{separable_conv2d.1} parent=5 // pred_fallthru
        _
      %p139 = scmp.le.s32.totalorder 1, %s12
      %p140 = scmp.lt.s32.totalorder %s12, 3
      %p141 = pnand %p139, %p140
      %p142 = pneg %p141
      // Predicated region
      $region29: #{separable_conv2d.1} parent=5 // pred_check
        _
      $region30: #{separable_conv2d.1} parent=5 // pred_check_branch
        %144 = sbr.rel (%p141) target = $region32
      $region31: #{separable_conv2d.1} parent=5 // pred_region
        %s145 = ssub.s32 %s12, 1
        %p146 = scmp.lt.s32.totalorder %s17, 1
        %s147 = scalar_select %p146, %s17, 1
        %s148 = smul.addr %s147, 54
        %s149 = smul.addr %s148, 8
        %s150 = scalar_lea.vmem %s0, %s149
        %p151 = pneg %p38
        %p152 = pneg %p35
        %p153 = pneg %p59
        %p154 = pneg %p56
        %p155 = pneg %p80
        %p156 = pneg %p77
        %p157 = pneg %p106
        %p158 = pneg %p103
        %s159 = sand.u32 %s93, 1
        %s160 = scalar_lea.sflag [#allocation3], %s159
        %s161 = sand.u32 %s93, 1
        %s162 = smul.addr %s161, 256
        %s163 = scalar_lea.vmem [#allocation2], %s162
        %p164 = scmp.lt.s32.totalorder %s17, 1
        %s165 = scalar_select %p164, %s17, 1
        %s166 = smul.addr %s165, 54
        %s167 = smul.addr %s166, 8
        %s168 = scalar_lea.vmem %s0, %s167
        %v170 = vld [vmem:[%s168] sm:$0xff]
        %v171 = vld [vmem:[%s168 + $0x8] sm:$0xff]
        %v172 = vld [vmem:[%s168 + $0x10] sm:$0x3]
        %v173 = vld [vmem:[%s168 + $0x18] sm:$0xff]
        %v174 = vld [vmem:[%s168 + $0x20] sm:$0xff]
        %v175 = vld [vmem:[%s168 + $0x28] sm:$0x3]
        %v176 = vld [vmem:[%s168 + $0x30] sm:$0xff]
        %v177 = vld [vmem:[%s168 + $0x38] sm:$0xff]
        %v178 = vld [vmem:[%s168 + $0x40] sm:$0x3]
        %v179 = vld [vmem:[%s168 + $0x48] sm:$0xff]
        %v180 = vld [vmem:[%s168 + $0x50] sm:$0xff]
        %v181 = vld [vmem:[%s168 + $0x58] sm:$0x3]
        %v182 = vld [vmem:[%s168 + $0x60] sm:$0xff]
        %v183 = vld [vmem:[%s168 + $0x68] sm:$0xff]
        %v184 = vld [vmem:[%s168 + $0x70] sm:$0x3]
        %v185 = vld [vmem:[%s168 + $0x78] sm:$0xff]
        %v186 = vld [vmem:[%s168 + $0x80] sm:$0xff]
        %v187 = vld [vmem:[%s168 + $0x88] sm:$0x3]
        %v188 = vld [vmem:[%s168 + $0x90] sm:$0xff]
        %v189 = vld [vmem:[%s168 + $0x98] sm:$0xff]
        %v190 = vld [vmem:[%s168 + $0xa0] sm:$0x3]
        %v191 = vld [vmem:[%s168 + $0xa8] sm:$0xff]
        %v192 = vld [vmem:[%s168 + $0xb0] sm:$0xff]
        %v193 = vld [vmem:[%s168 + $0xb8] sm:$0x3]
        %v194 = vld [vmem:[%s168 + $0xc0] sm:$0xff]
        %v195 = vld [vmem:[%s168 + $0xc8] sm:$0xff]
        %v196 = vld [vmem:[%s168 + $0xd0] sm:$0x3]
        %v197 = vld [vmem:[%s168 + $0xd8] sm:$0xff]
        %v198 = vld [vmem:[%s168 + $0xe0] sm:$0xff]
        %v199 = vld [vmem:[%s168 + $0xe8] sm:$0x3]
        %v200 = vld [vmem:[%s168 + $0xf0] sm:$0xff]
        %v201 = vld [vmem:[%s168 + $0xf8] sm:$0xff]
        %v202 = vld [vmem:[%s168 + $0x100] sm:$0x3]
        %v203 = vld [vmem:[%s168 + $0x108] sm:$0xff]
        %v204 = vld [vmem:[%s168 + $0x110] sm:$0xff]
        %v205 = vld [vmem:[%s168 + $0x118] sm:$0x3]
        %v206 = vld [vmem:[%s168 + $0x120] sm:$0xff]
        %v207 = vld [vmem:[%s168 + $0x128] sm:$0xff]
        %v208 = vld [vmem:[%s168 + $0x130] sm:$0x3]
        %v209 = vld [vmem:[%s168 + $0x138] sm:$0xff]
        %v210 = vld [vmem:[%s168 + $0x140] sm:$0xff]
        %v211 = vld [vmem:[%s168 + $0x148] sm:$0x3]
        %v212 = vld [vmem:[%s168 + $0x150] sm:$0xff]
        %v213 = vld [vmem:[%s168 + $0x158] sm:$0xff]
        %v214 = vld [vmem:[%s168 + $0x160] sm:$0x3]
        %v215 = vld [vmem:[%s168 + $0x168] sm:$0xff]
        %v216 = vld [vmem:[%s168 + $0x170] sm:$0xff]
        %v217 = vld [vmem:[%s168 + $0x178] sm:$0x3]
        %v218 = vld [vmem:[%s168 + $0x180] sm:$0xff]
        %v219 = vld [vmem:[%s168 + $0x188] sm:$0xff]
        %v220 = vld [vmem:[%s168 + $0x190] sm:$0x3]
        %v221 = vld [vmem:[%s168 + $0x198] sm:$0xff]
        %v222 = vld [vmem:[%s168 + $0x1a0] sm:$0xff]
        %v223 = vld [vmem:[%s168 + $0x1a8] sm:$0x3]
        %v224 = vld [vmem:[%s1] sm:$0x1]
        %v225 = vlaneseq
        %v226 = vshrl.u32 %v225, 7
        %v227 = vsub.s32 0, %v226
        %v228 = vrot.slane %v224, %v227
        %v229 = vmul.f32 %v170, %v228
        %v230 = vmul.f32 %v171, %v228
        %v231 = vmul.f32 %v173, %v228
        %v232 = vmul.f32 %v174, %v228
        %v233 = vmul.f32 %v176, %v228
        %v234 = vmul.f32 %v177, %v228
        %v235 = vmul.f32 %v179, %v228
        %v236 = vmul.f32 %v180, %v228
        %v237 = vmul.f32 %v182, %v228
        %v238 = vmul.f32 %v183, %v228
        %v239 = vmul.f32 %v185, %v228
        %v240 = vmul.f32 %v186, %v228
        %v241 = vmul.f32 %v188, %v228
        %v242 = vmul.f32 %v189, %v228
        %v243 = vmul.f32 %v191, %v228
        %v244 = vmul.f32 %v192, %v228
        %v245 = vmul.f32 %v194, %v228
        %v246 = vmul.f32 %v195, %v228
        %v247 = vmul.f32 %v197, %v228
        %v248 = vmul.f32 %v198, %v228
        %v249 = vmul.f32 %v200, %v228
        %v250 = vmul.f32 %v201, %v228
        %v251 = vmul.f32 %v203, %v228
        %v252 = vmul.f32 %v204, %v228
        %v253 = vmul.f32 %v206, %v228
        %v254 = vmul.f32 %v207, %v228
        %v255 = vmul.f32 %v209, %v228
        %v256 = vmul.f32 %v210, %v228
        %v257 = vmul.f32 %v212, %v228
        %v258 = vmul.f32 %v213, %v228
        %v259 = vmul.f32 %v215, %v228
        %v260 = vmul.f32 %v216, %v228
        %v261 = vadd.f32 %v229, 0.0
        %v262 = vadd.f32 %v230, 0.0
        %v263 = vadd.f32 %v231, 0.0
        %v264 = vadd.f32 %v232, 0.0
        %v265 = vadd.f32 %v233, 0.0
        %v266 = vadd.f32 %v234, 0.0
        %v267 = vadd.f32 %v235, 0.0
        %v268 = vadd.f32 %v236, 0.0
        %v269 = vadd.f32 %v237, 0.0
        %v270 = vadd.f32 %v238, 0.0
        %v271 = vadd.f32 %v239, 0.0
        %v272 = vadd.f32 %v240, 0.0
        %v273 = vadd.f32 %v241, 0.0
        %v274 = vadd.f32 %v242, 0.0
        %v275 = vadd.f32 %v243, 0.0
        %v276 = vadd.f32 %v244, 0.0
        %v277 = vadd.f32 %v245, 0.0
        %v278 = vadd.f32 %v246, 0.0
        %v279 = vadd.f32 %v247, 0.0
        %v280 = vadd.f32 %v248, 0.0
        %v281 = vadd.f32 %v249, 0.0
        %v282 = vadd.f32 %v250, 0.0
        %v283 = vadd.f32 %v251, 0.0
        %v284 = vadd.f32 %v252, 0.0
        %v285 = vadd.f32 %v253, 0.0
        %v286 = vadd.f32 %v254, 0.0
        %v287 = vadd.f32 %v255, 0.0
        %v288 = vadd.f32 %v256, 0.0
        %v289 = vadd.f32 %v257, 0.0
        %v290 = vadd.f32 %v258, 0.0
        %v291 = vadd.f32 %v259, 0.0
        %v292 = vadd.f32 %v260, 0.0
        %v293 = vld [vmem:[%s1 + $0x1] sm:$0x1]
        %v294 = vlaneseq
        %v295 = vshrl.u32 %v294, 7
        %v296 = vsub.s32 0, %v295
        %v297 = vrot.slane %v293, %v296
        %v298 = vmul.f32 %v170, %v297
        %v299 = vmul.f32 %v171, %v297
        %v300 = vmul.f32 %v172, %v297
        %v301 = vmul.f32 %v173, %v297
        %v302 = vmul.f32 %v174, %v297
        %v303 = vmul.f32 %v175, %v297
        %v304 = vmul.f32 %v176, %v297
        %v305 = vmul.f32 %v177, %v297
        %v306 = vmul.f32 %v178, %v297
        %v307 = vmul.f32 %v179, %v297
        %v308 = vmul.f32 %v180, %v297
        %v309 = vmul.f32 %v181, %v297
        %v310 = vmul.f32 %v182, %v297
        %v311 = vmul.f32 %v183, %v297
        %v312 = vmul.f32 %v184, %v297
        %v313 = vmul.f32 %v185, %v297
        %v314 = vmul.f32 %v186, %v297
        %v315 = vmul.f32 %v187, %v297
        %v316 = vmul.f32 %v188, %v297
        %v317 = vmul.f32 %v189, %v297
        %v318 = vmul.f32 %v190, %v297
        %v319 = vmul.f32 %v191, %v297
        %v320 = vmul.f32 %v192, %v297
        %v321 = vmul.f32 %v193, %v297
        %v322 = vmul.f32 %v194, %v297
        %v323 = vmul.f32 %v195, %v297
        %v324 = vmul.f32 %v196, %v297
        %v325 = vmul.f32 %v197, %v297
        %v326 = vmul.f32 %v198, %v297
        %v327 = vmul.f32 %v199, %v297
        %v328 = vmul.f32 %v200, %v297
        %v329 = vmul.f32 %v201, %v297
        %v330 = vmul.f32 %v202, %v297
        %v331 = vmul.f32 %v203, %v297
        %v332 = vmul.f32 %v204, %v297
        %v333 = vmul.f32 %v205, %v297
        %v334 = vmul.f32 %v206, %v297
        %v335 = vmul.f32 %v207, %v297
        %v336 = vmul.f32 %v208, %v297
        %v337 = vmul.f32 %v209, %v297
        %v338 = vmul.f32 %v210, %v297
        %v339 = vmul.f32 %v211, %v297
        %v340 = vmul.f32 %v212, %v297
        %v341 = vmul.f32 %v213, %v297
        %v342 = vmul.f32 %v214, %v297
        %v343 = vmul.f32 %v215, %v297
        %v344 = vmul.f32 %v216, %v297
        %v345 = vmul.f32 %v217, %v297
        %vm394 = vcmask 1046528
        %v395 = vrot.slane %v298, 1
        %v396 = vrot.slane %v299, 1
        %v397 = vsel %vm394, %v395, %v396
        %v398 = vrot.slane %v300, 1
        %v399 = vsel %vm394, %v396, %v398
        %v400 = vrot.slane %v301, 1
        %v401 = vrot.slane %v302, 1
        %v402 = vsel %vm394, %v400, %v401
        %v403 = vrot.slane %v303, 1
        %v404 = vsel %vm394, %v401, %v403
        %v405 = vrot.slane %v304, 1
        %v406 = vrot.slane %v305, 1
        %v407 = vsel %vm394, %v405, %v406
        %v408 = vrot.slane %v306, 1
        %v409 = vsel %vm394, %v406, %v408
        %v410 = vrot.slane %v307, 1
        %v411 = vrot.slane %v308, 1
        %v412 = vsel %vm394, %v410, %v411
        %v413 = vrot.slane %v309, 1
        %v414 = vsel %vm394, %v411, %v413
        %v415 = vrot.slane %v310, 1
        %v416 = vrot.slane %v311, 1
        %v417 = vsel %vm394, %v415, %v416
        %v418 = vrot.slane %v312, 1
        %v419 = vsel %vm394, %v416, %v418
        %v420 = vrot.slane %v313, 1
        %v421 = vrot.slane %v314, 1
        %v422 = vsel %vm394, %v420, %v421
        %v423 = vrot.slane %v315, 1
        %v424 = vsel %vm394, %v421, %v423
        %v425 = vrot.slane %v316, 1
        %v426 = vrot.slane %v317, 1
        %v427 = vsel %vm394, %v425, %v426
        %v428 = vrot.slane %v318, 1
        %v429 = vsel %vm394, %v426, %v428
        %v430 = vrot.slane %v319, 1
        %v431 = vrot.slane %v320, 1
        %v432 = vsel %vm394, %v430, %v431
        %v433 = vrot.slane %v321, 1
        %v434 = vsel %vm394, %v431, %v433
        %v435 = vrot.slane %v322, 1
        %v436 = vrot.slane %v323, 1
        %v437 = vsel %vm394, %v435, %v436
        %v438 = vrot.slane %v324, 1
        %v439 = vsel %vm394, %v436, %v438
        %v440 = vrot.slane %v325, 1
        %v441 = vrot.slane %v326, 1
        %v442 = vsel %vm394, %v440, %v441
        %v443 = vrot.slane %v327, 1
        %v444 = vsel %vm394, %v441, %v443
        %v445 = vrot.slane %v328, 1
        %v446 = vrot.slane %v329, 1
        %v447 = vsel %vm394, %v445, %v446
        %v448 = vrot.slane %v330, 1
        %v449 = vsel %vm394, %v446, %v448
        %v450 = vrot.slane %v331, 1
        %v451 = vrot.slane %v332, 1
        %v452 = vsel %vm394, %v450, %v451
        %v453 = vrot.slane %v333, 1
        %v454 = vsel %vm394, %v451, %v453
        %v455 = vrot.slane %v334, 1
        %v456 = vrot.slane %v335, 1
        %v457 = vsel %vm394, %v455, %v456
        %v458 = vrot.slane %v336, 1
        %v459 = vsel %vm394, %v456, %v458
        %v460 = vrot.slane %v337, 1
        %v461 = vrot.slane %v338, 1
        %v462 = vsel %vm394, %v460, %v461
        %v463 = vrot.slane %v339, 1
        %v464 = vsel %vm394, %v461, %v463
        %v465 = vrot.slane %v340, 1
        %v466 = vrot.slane %v341, 1
        %v467 = vsel %vm394, %v465, %v466
        %v468 = vrot.slane %v342, 1
        %v469 = vsel %vm394, %v466, %v468
        %v470 = vrot.slane %v343, 1
        %v471 = vrot.slane %v344, 1
        %v472 = vsel %vm394, %v470, %v471
        %v473 = vrot.slane %v345, 1
        %v474 = vsel %vm394, %v471, %v473
        %v507 = vadd.f32 %v261, %v397
        %v508 = vadd.f32 %v262, %v399
        %v509 = vadd.f32 %v263, %v402
        %v510 = vadd.f32 %v264, %v404
        %v511 = vadd.f32 %v265, %v407
        %v512 = vadd.f32 %v266, %v409
        %v513 = vadd.f32 %v267, %v412
        %v514 = vadd.f32 %v268, %v414
        %v515 = vadd.f32 %v269, %v417
        %v516 = vadd.f32 %v270, %v419
        %v517 = vadd.f32 %v271, %v422
        %v518 = vadd.f32 %v272, %v424
        %v519 = vadd.f32 %v273, %v427
        %v520 = vadd.f32 %v274, %v429
        %v521 = vadd.f32 %v275, %v432
        %v522 = vadd.f32 %v276, %v434
        %v523 = vadd.f32 %v277, %v437
        %v524 = vadd.f32 %v278, %v439
        %v525 = vadd.f32 %v279, %v442
        %v526 = vadd.f32 %v280, %v444
        %v527 = vadd.f32 %v281, %v447
        %v528 = vadd.f32 %v282, %v449
        %v529 = vadd.f32 %v283, %v452
        %v530 = vadd.f32 %v284, %v454
        %v531 = vadd.f32 %v285, %v457
        %v532 = vadd.f32 %v286, %v459
        %v533 = vadd.f32 %v287, %v462
        %v534 = vadd.f32 %v288, %v464
        %v535 = vadd.f32 %v289, %v467
        %v536 = vadd.f32 %v290, %v469
        %v537 = vadd.f32 %v291, %v472
        %v538 = vadd.f32 %v292, %v474
        %v539 = vld [vmem:[%s1 + $0x2] sm:$0x1]
        %v540 = vlaneseq
        %v541 = vshrl.u32 %v540, 7
        %v542 = vsub.s32 0, %v541
        %v543 = vrot.slane %v539, %v542
        %v544 = vmul.f32 %v170, %v543
        %v545 = vmul.f32 %v171, %v543
        %v546 = vmul.f32 %v172, %v543
        %v547 = vmul.f32 %v173, %v543
        %v548 = vmul.f32 %v174, %v543
        %v549 = vmul.f32 %v175, %v543
        %v550 = vmul.f32 %v176, %v543
        %v551 = vmul.f32 %v177, %v543
        %v552 = vmul.f32 %v178, %v543
        %v553 = vmul.f32 %v179, %v543
        %v554 = vmul.f32 %v180, %v543
        %v555 = vmul.f32 %v181, %v543
        %v556 = vmul.f32 %v182, %v543
        %v557 = vmul.f32 %v183, %v543
        %v558 = vmul.f32 %v184, %v543
        %v559 = vmul.f32 %v185, %v543
        %v560 = vmul.f32 %v186, %v543
        %v561 = vmul.f32 %v187, %v543
        %v562 = vmul.f32 %v188, %v543
        %v563 = vmul.f32 %v189, %v543
        %v564 = vmul.f32 %v190, %v543
        %v565 = vmul.f32 %v191, %v543
        %v566 = vmul.f32 %v192, %v543
        %v567 = vmul.f32 %v193, %v543
        %v568 = vmul.f32 %v194, %v543
        %v569 = vmul.f32 %v195, %v543
        %v570 = vmul.f32 %v196, %v543
        %v571 = vmul.f32 %v197, %v543
        %v572 = vmul.f32 %v198, %v543
        %v573 = vmul.f32 %v199, %v543
        %v574 = vmul.f32 %v200, %v543
        %v575 = vmul.f32 %v201, %v543
        %v576 = vmul.f32 %v202, %v543
        %v577 = vmul.f32 %v203, %v543
        %v578 = vmul.f32 %v204, %v543
        %v579 = vmul.f32 %v205, %v543
        %v580 = vmul.f32 %v206, %v543
        %v581 = vmul.f32 %v207, %v543
        %v582 = vmul.f32 %v208, %v543
        %v583 = vmul.f32 %v209, %v543
        %v584 = vmul.f32 %v210, %v543
        %v585 = vmul.f32 %v211, %v543
        %v586 = vmul.f32 %v212, %v543
        %v587 = vmul.f32 %v213, %v543
        %v588 = vmul.f32 %v214, %v543
        %v589 = vmul.f32 %v215, %v543
        %v590 = vmul.f32 %v216, %v543
        %v591 = vmul.f32 %v217, %v543
        %vm640 = vcmask 1045504
        %v641 = vrot.slane %v544, 2
        %v642 = vrot.slane %v545, 2
        %v643 = vsel %vm640, %v641, %v642
        %v644 = vrot.slane %v546, 2
        %v645 = vsel %vm640, %v642, %v644
        %v646 = vrot.slane %v547, 2
        %v647 = vrot.slane %v548, 2
        %v648 = vsel %vm640, %v646, %v647
        %v649 = vrot.slane %v549, 2
        %v650 = vsel %vm640, %v647, %v649
        %v651 = vrot.slane %v550, 2
        %v652 = vrot.slane %v551, 2
        %v653 = vsel %vm640, %v651, %v652
        %v654 = vrot.slane %v552, 2
        %v655 = vsel %vm640, %v652, %v654
        %v656 = vrot.slane %v553, 2
        %v657 = vrot.slane %v554, 2
        %v658 = vsel %vm640, %v656, %v657
        %v659 = vrot.slane %v555, 2
        %v660 = vsel %vm640, %v657, %v659
        %v661 = vrot.slane %v556, 2
        %v662 = vrot.slane %v557, 2
        %v663 = vsel %vm640, %v661, %v662
        %v664 = vrot.slane %v558, 2
        %v665 = vsel %vm640, %v662, %v664
        %v666 = vrot.slane %v559, 2
        %v667 = vrot.slane %v560, 2
        %v668 = vsel %vm640, %v666, %v667
        %v669 = vrot.slane %v561, 2
        %v670 = vsel %vm640, %v667, %v669
        %v671 = vrot.slane %v562, 2
        %v672 = vrot.slane %v563, 2
        %v673 = vsel %vm640, %v671, %v672
        %v674 = vrot.slane %v564, 2
        %v675 = vsel %vm640, %v672, %v674
        %v676 = vrot.slane %v565, 2
        %v677 = vrot.slane %v566, 2
        %v678 = vsel %vm640, %v676, %v677
        %v679 = vrot.slane %v567, 2
        %v680 = vsel %vm640, %v677, %v679
        %v681 = vrot.slane %v568, 2
        %v682 = vrot.slane %v569, 2
        %v683 = vsel %vm640, %v681, %v682
        %v684 = vrot.slane %v570, 2
        %v685 = vsel %vm640, %v682, %v684
        %v686 = vrot.slane %v571, 2
        %v687 = vrot.slane %v572, 2
        %v688 = vsel %vm640, %v686, %v687
        %v689 = vrot.slane %v573, 2
        %v690 = vsel %vm640, %v687, %v689
        %v691 = vrot.slane %v574, 2
        %v692 = vrot.slane %v575, 2
        %v693 = vsel %vm640, %v691, %v692
        %v694 = vrot.slane %v576, 2
        %v695 = vsel %vm640, %v692, %v694
        %v696 = vrot.slane %v577, 2
        %v697 = vrot.slane %v578, 2
        %v698 = vsel %vm640, %v696, %v697
        %v699 = vrot.slane %v579, 2
        %v700 = vsel %vm640, %v697, %v699
        %v701 = vrot.slane %v580, 2
        %v702 = vrot.slane %v581, 2
        %v703 = vsel %vm640, %v701, %v702
        %v704 = vrot.slane %v582, 2
        %v705 = vsel %vm640, %v702, %v704
        %v706 = vrot.slane %v583, 2
        %v707 = vrot.slane %v584, 2
        %v708 = vsel %vm640, %v706, %v707
        %v709 = vrot.slane %v585, 2
        %v710 = vsel %vm640, %v707, %v709
        %v711 = vrot.slane %v586, 2
        %v712 = vrot.slane %v587, 2
        %v713 = vsel %vm640, %v711, %v712
        %v714 = vrot.slane %v588, 2
        %v715 = vsel %vm640, %v712, %v714
        %v716 = vrot.slane %v589, 2
        %v717 = vrot.slane %v590, 2
        %v718 = vsel %vm640, %v716, %v717
        %v719 = vrot.slane %v591, 2
        %v720 = vsel %vm640, %v717, %v719
        %v753 = vadd.f32 %v507, %v643
        %v754 = vadd.f32 %v508, %v645
        %v755 = vadd.f32 %v509, %v648
        %v756 = vadd.f32 %v510, %v650
        %v757 = vadd.f32 %v511, %v653
        %v758 = vadd.f32 %v512, %v655
        %v759 = vadd.f32 %v513, %v658
        %v760 = vadd.f32 %v514, %v660
        %v761 = vadd.f32 %v515, %v663
        %v762 = vadd.f32 %v516, %v665
        %v763 = vadd.f32 %v517, %v668
        %v764 = vadd.f32 %v518, %v670
        %v765 = vadd.f32 %v519, %v673
        %v766 = vadd.f32 %v520, %v675
        %v767 = vadd.f32 %v521, %v678
        %v768 = vadd.f32 %v522, %v680
        %v769 = vadd.f32 %v523, %v683
        %v770 = vadd.f32 %v524, %v685
        %v771 = vadd.f32 %v525, %v688
        %v772 = vadd.f32 %v526, %v690
        %v773 = vadd.f32 %v527, %v693
        %v774 = vadd.f32 %v528, %v695
        %v775 = vadd.f32 %v529, %v698
        %v776 = vadd.f32 %v530, %v700
        %v777 = vadd.f32 %v531, %v703
        %v778 = vadd.f32 %v532, %v705
        %v779 = vadd.f32 %v533, %v708
        %v780 = vadd.f32 %v534, %v710
        %v781 = vadd.f32 %v535, %v713
        %v782 = vadd.f32 %v536, %v715
        %v783 = vadd.f32 %v537, %v718
        %v784 = vadd.f32 %v538, %v720
        %v785 = vld [vmem:[%s1 + $0x3] sm:$0x1]
        %v786 = vlaneseq
        %v787 = vshrl.u32 %v786, 7
        %v788 = vsub.s32 0, %v787
        %v789 = vrot.slane %v785, %v788
        %v790 = vmul.f32 %v173, %v789
        %v791 = vmul.f32 %v174, %v789
        %v792 = vmul.f32 %v176, %v789
        %v793 = vmul.f32 %v177, %v789
        %v794 = vmul.f32 %v179, %v789
        %v795 = vmul.f32 %v180, %v789
        %v796 = vmul.f32 %v182, %v789
        %v797 = vmul.f32 %v183, %v789
        %v798 = vmul.f32 %v185, %v789
        %v799 = vmul.f32 %v186, %v789
        %v800 = vmul.f32 %v188, %v789
        %v801 = vmul.f32 %v189, %v789
        %v802 = vmul.f32 %v191, %v789
        %v803 = vmul.f32 %v192, %v789
        %v804 = vmul.f32 %v194, %v789
        %v805 = vmul.f32 %v195, %v789
        %v806 = vmul.f32 %v197, %v789
        %v807 = vmul.f32 %v198, %v789
        %v808 = vmul.f32 %v200, %v789
        %v809 = vmul.f32 %v201, %v789
        %v810 = vmul.f32 %v203, %v789
        %v811 = vmul.f32 %v204, %v789
        %v812 = vmul.f32 %v206, %v789
        %v813 = vmul.f32 %v207, %v789
        %v814 = vmul.f32 %v209, %v789
        %v815 = vmul.f32 %v210, %v789
        %v816 = vmul.f32 %v212, %v789
        %v817 = vmul.f32 %v213, %v789
        %v818 = vmul.f32 %v215, %v789
        %v819 = vmul.f32 %v216, %v789
        %v820 = vmul.f32 %v218, %v789
        %v821 = vmul.f32 %v219, %v789
        %v822 = vadd.f32 %v753, %v790
        %v823 = vadd.f32 %v754, %v791
        %v824 = vadd.f32 %v755, %v792
        %v825 = vadd.f32 %v756, %v793
        %v826 = vadd.f32 %v757, %v794
        %v827 = vadd.f32 %v758, %v795
        %v828 = vadd.f32 %v759, %v796
        %v829 = vadd.f32 %v760, %v797
        %v830 = vadd.f32 %v761, %v798
        %v831 = vadd.f32 %v762, %v799
        %v832 = vadd.f32 %v763, %v800
        %v833 = vadd.f32 %v764, %v801
        %v834 = vadd.f32 %v765, %v802
        %v835 = vadd.f32 %v766, %v803
        %v836 = vadd.f32 %v767, %v804
        %v837 = vadd.f32 %v768, %v805
        %v838 = vadd.f32 %v769, %v806
        %v839 = vadd.f32 %v770, %v807
        %v840 = vadd.f32 %v771, %v808
        %v841 = vadd.f32 %v772, %v809
        %v842 = vadd.f32 %v773, %v810
        %v843 = vadd.f32 %v774, %v811
        %v844 = vadd.f32 %v775, %v812
        %v845 = vadd.f32 %v776, %v813
        %v846 = vadd.f32 %v777, %v814
        %v847 = vadd.f32 %v778, %v815
        %v848 = vadd.f32 %v779, %v816
        %v849 = vadd.f32 %v780, %v817
        %v850 = vadd.f32 %v781, %v818
        %v851 = vadd.f32 %v782, %v819
        %v852 = vadd.f32 %v783, %v820
        %v853 = vadd.f32 %v784, %v821
        %v854 = vld [vmem:[%s1 + $0x4] sm:$0x1]
        %v855 = vlaneseq
        %v856 = vshrl.u32 %v855, 7
        %v857 = vsub.s32 0, %v856
        %v858 = vrot.slane %v854, %v857
        %v859 = vmul.f32 %v173, %v858
        %v860 = vmul.f32 %v174, %v858
        %v861 = vmul.f32 %v175, %v858
        %v862 = vmul.f32 %v176, %v858
        %v863 = vmul.f32 %v177, %v858
        %v864 = vmul.f32 %v178, %v858
        %v865 = vmul.f32 %v179, %v858
        %v866 = vmul.f32 %v180, %v858
        %v867 = vmul.f32 %v181, %v858
        %v868 = vmul.f32 %v182, %v858
        %v869 = vmul.f32 %v183, %v858
        %v870 = vmul.f32 %v184, %v858
        %v871 = vmul.f32 %v185, %v858
        %v872 = vmul.f32 %v186, %v858
        %v873 = vmul.f32 %v187, %v858
        %v874 = vmul.f32 %v188, %v858
        %v875 = vmul.f32 %v189, %v858
        %v876 = vmul.f32 %v190, %v858
        %v877 = vmul.f32 %v191, %v858
        %v878 = vmul.f32 %v192, %v858
        %v879 = vmul.f32 %v193, %v858
        %v880 = vmul.f32 %v194, %v858
        %v881 = vmul.f32 %v195, %v858
        %v882 = vmul.f32 %v196, %v858
        %v883 = vmul.f32 %v197, %v858
        %v884 = vmul.f32 %v198, %v858
        %v885 = vmul.f32 %v199, %v858
        %v886 = vmul.f32 %v200, %v858
        %v887 = vmul.f32 %v201, %v858
        %v888 = vmul.f32 %v202, %v858
        %v889 = vmul.f32 %v203, %v858
        %v890 = vmul.f32 %v204, %v858
        %v891 = vmul.f32 %v205, %v858
        %v892 = vmul.f32 %v206, %v858
        %v893 = vmul.f32 %v207, %v858
        %v894 = vmul.f32 %v208, %v858
        %v895 = vmul.f32 %v209, %v858
        %v896 = vmul.f32 %v210, %v858
        %v897 = vmul.f32 %v211, %v858
        %v898 = vmul.f32 %v212, %v858
        %v899 = vmul.f32 %v213, %v858
        %v900 = vmul.f32 %v214, %v858
        %v901 = vmul.f32 %v215, %v858
        %v902 = vmul.f32 %v216, %v858
        %v903 = vmul.f32 %v217, %v858
        %v904 = vmul.f32 %v218, %v858
        %v905 = vmul.f32 %v219, %v858
        %v906 = vmul.f32 %v220, %v858
        %v955 = vrot.slane %v859, 1
        %v956 = vrot.slane %v860, 1
        %v957 = vsel %vm394, %v955, %v956
        %v958 = vrot.slane %v861, 1
        %v959 = vsel %vm394, %v956, %v958
        %v960 = vrot.slane %v862, 1
        %v961 = vrot.slane %v863, 1
        %v962 = vsel %vm394, %v960, %v961
        %v963 = vrot.slane %v864, 1
        %v964 = vsel %vm394, %v961, %v963
        %v965 = vrot.slane %v865, 1
        %v966 = vrot.slane %v866, 1
        %v967 = vsel %vm394, %v965, %v966
        %v968 = vrot.slane %v867, 1
        %v969 = vsel %vm394, %v966, %v968
        %v970 = vrot.slane %v868, 1
        %v971 = vrot.slane %v869, 1
        %v972 = vsel %vm394, %v970, %v971
        %v973 = vrot.slane %v870, 1
        %v974 = vsel %vm394, %v971, %v973
        %v975 = vrot.slane %v871, 1
        %v976 = vrot.slane %v872, 1
        %v977 = vsel %vm394, %v975, %v976
        %v978 = vrot.slane %v873, 1
        %v979 = vsel %vm394, %v976, %v978
        %v980 = vrot.slane %v874, 1
        %v981 = vrot.slane %v875, 1
        %v982 = vsel %vm394, %v980, %v981
        %v983 = vrot.slane %v876, 1
        %v984 = vsel %vm394, %v981, %v983
        %v985 = vrot.slane %v877, 1
        %v986 = vrot.slane %v878, 1
        %v987 = vsel %vm394, %v985, %v986
        %v988 = vrot.slane %v879, 1
        %v989 = vsel %vm394, %v986, %v988
        %v990 = vrot.slane %v880, 1
        %v991 = vrot.slane %v881, 1
        %v992 = vsel %vm394, %v990, %v991
        %v993 = vrot.slane %v882, 1
        %v994 = vsel %vm394, %v991, %v993
        %v995 = vrot.slane %v883, 1
        %v996 = vrot.slane %v884, 1
        %v997 = vsel %vm394, %v995, %v996
        %v998 = vrot.slane %v885, 1
        %v999 = vsel %vm394, %v996, %v998
        %v1000 = vrot.slane %v886, 1
        %v1001 = vrot.slane %v887, 1
        %v1002 = vsel %vm394, %v1000, %v1001
        %v1003 = vrot.slane %v888, 1
        %v1004 = vsel %vm394, %v1001, %v1003
        %v1005 = vrot.slane %v889, 1
        %v1006 = vrot.slane %v890, 1
        %v1007 = vsel %vm394, %v1005, %v1006
        %v1008 = vrot.slane %v891, 1
        %v1009 = vsel %vm394, %v1006, %v1008
        %v1010 = vrot.slane %v892, 1
        %v1011 = vrot.slane %v893, 1
        %v1012 = vsel %vm394, %v1010, %v1011
        %v1013 = vrot.slane %v894, 1
        %v1014 = vsel %vm394, %v1011, %v1013
        %v1015 = vrot.slane %v895, 1
        %v1016 = vrot.slane %v896, 1
        %v1017 = vsel %vm394, %v1015, %v1016
        %v1018 = vrot.slane %v897, 1
        %v1019 = vsel %vm394, %v1016, %v1018
        %v1020 = vrot.slane %v898, 1
        %v1021 = vrot.slane %v899, 1
        %v1022 = vsel %vm394, %v1020, %v1021
        %v1023 = vrot.slane %v900, 1
        %v1024 = vsel %vm394, %v1021, %v1023
        %v1025 = vrot.slane %v901, 1
        %v1026 = vrot.slane %v902, 1
        %v1027 = vsel %vm394, %v1025, %v1026
        %v1028 = vrot.slane %v903, 1
        %v1029 = vsel %vm394, %v1026, %v1028
        %v1030 = vrot.slane %v904, 1
        %v1031 = vrot.slane %v905, 1
        %v1032 = vsel %vm394, %v1030, %v1031
        %v1033 = vrot.slane %v906, 1
        %v1034 = vsel %vm394, %v1031, %v1033
        %v1067 = vadd.f32 %v822, %v957
        %v1068 = vadd.f32 %v823, %v959
        %v1069 = vadd.f32 %v824, %v962
        %v1070 = vadd.f32 %v825, %v964
        %v1071 = vadd.f32 %v826, %v967
        %v1072 = vadd.f32 %v827, %v969
        %v1073 = vadd.f32 %v828, %v972
        %v1074 = vadd.f32 %v829, %v974
        %v1075 = vadd.f32 %v830, %v977
        %v1076 = vadd.f32 %v831, %v979
        %v1077 = vadd.f32 %v832, %v982
        %v1078 = vadd.f32 %v833, %v984
        %v1079 = vadd.f32 %v834, %v987
        %v1080 = vadd.f32 %v835, %v989
        %v1081 = vadd.f32 %v836, %v992
        %v1082 = vadd.f32 %v837, %v994
        %v1083 = vadd.f32 %v838, %v997
        %v1084 = vadd.f32 %v839, %v999
        %v1085 = vadd.f32 %v840, %v1002
        %v1086 = vadd.f32 %v841, %v1004
        %v1087 = vadd.f32 %v842, %v1007
        %v1088 = vadd.f32 %v843, %v1009
        %v1089 = vadd.f32 %v844, %v1012
        %v1090 = vadd.f32 %v845, %v1014
        %v1091 = vadd.f32 %v846, %v1017
        %v1092 = vadd.f32 %v847, %v1019
        %v1093 = vadd.f32 %v848, %v1022
        %v1094 = vadd.f32 %v849, %v1024
        %v1095 = vadd.f32 %v850, %v1027
        %v1096 = vadd.f32 %v851, %v1029
        %v1097 = vadd.f32 %v852, %v1032
        %v1098 = vadd.f32 %v853, %v1034
        %v1099 = vld [vmem:[%s1 + $0x5] sm:$0x1]
        %v1100 = vlaneseq
        %v1101 = vshrl.u32 %v1100, 7
        %v1102 = vsub.s32 0, %v1101
        %v1103 = vrot.slane %v1099, %v1102
        %v1104 = vmul.f32 %v173, %v1103
        %v1105 = vmul.f32 %v174, %v1103
        %v1106 = vmul.f32 %v175, %v1103
        %v1107 = vmul.f32 %v176, %v1103
        %v1108 = vmul.f32 %v177, %v1103
        %v1109 = vmul.f32 %v178, %v1103
        %v1110 = vmul.f32 %v179, %v1103
        %v1111 = vmul.f32 %v180, %v1103
        %v1112 = vmul.f32 %v181, %v1103
        %v1113 = vmul.f32 %v182, %v1103
        %v1114 = vmul.f32 %v183, %v1103
        %v1115 = vmul.f32 %v184, %v1103
        %v1116 = vmul.f32 %v185, %v1103
        %v1117 = vmul.f32 %v186, %v1103
        %v1118 = vmul.f32 %v187, %v1103
        %v1119 = vmul.f32 %v188, %v1103
        %v1120 = vmul.f32 %v189, %v1103
        %v1121 = vmul.f32 %v190, %v1103
        %v1122 = vmul.f32 %v191, %v1103
        %v1123 = vmul.f32 %v192, %v1103
        %v1124 = vmul.f32 %v193, %v1103
        %v1125 = vmul.f32 %v194, %v1103
        %v1126 = vmul.f32 %v195, %v1103
        %v1127 = vmul.f32 %v196, %v1103
        %v1128 = vmul.f32 %v197, %v1103
        %v1129 = vmul.f32 %v198, %v1103
        %v1130 = vmul.f32 %v199, %v1103
        %v1131 = vmul.f32 %v200, %v1103
        %v1132 = vmul.f32 %v201, %v1103
        %v1133 = vmul.f32 %v202, %v1103
        %v1134 = vmul.f32 %v203, %v1103
        %v1135 = vmul.f32 %v204, %v1103
        %v1136 = vmul.f32 %v205, %v1103
        %v1137 = vmul.f32 %v206, %v1103
        %v1138 = vmul.f32 %v207, %v1103
        %v1139 = vmul.f32 %v208, %v1103
        %v1140 = vmul.f32 %v209, %v1103
        %v1141 = vmul.f32 %v210, %v1103
        %v1142 = vmul.f32 %v211, %v1103
        %v1143 = vmul.f32 %v212, %v1103
        %v1144 = vmul.f32 %v213, %v1103
        %v1145 = vmul.f32 %v214, %v1103
        %v1146 = vmul.f32 %v215, %v1103
        %v1147 = vmul.f32 %v216, %v1103
        %v1148 = vmul.f32 %v217, %v1103
        %v1149 = vmul.f32 %v218, %v1103
        %v1150 = vmul.f32 %v219, %v1103
        %v1151 = vmul.f32 %v220, %v1103
        %v1200 = vrot.slane %v1104, 2
        %v1201 = vrot.slane %v1105, 2
        %v1202 = vsel %vm640, %v1200, %v1201
        %v1203 = vrot.slane %v1106, 2
        %v1204 = vsel %vm640, %v1201, %v1203
        %v1205 = vrot.slane %v1107, 2
        %v1206 = vrot.slane %v1108, 2
        %v1207 = vsel %vm640, %v1205, %v1206
        %v1208 = vrot.slane %v1109, 2
        %v1209 = vsel %vm640, %v1206, %v1208
        %v1210 = vrot.slane %v1110, 2
        %v1211 = vrot.slane %v1111, 2
        %v1212 = vsel %vm640, %v1210, %v1211
        %v1213 = vrot.slane %v1112, 2
        %v1214 = vsel %vm640, %v1211, %v1213
        %v1215 = vrot.slane %v1113, 2
        %v1216 = vrot.slane %v1114, 2
        %v1217 = vsel %vm640, %v1215, %v1216
        %v1218 = vrot.slane %v1115, 2
        %v1219 = vsel %vm640, %v1216, %v1218
        %v1220 = vrot.slane %v1116, 2
        %v1221 = vrot.slane %v1117, 2
        %v1222 = vsel %vm640, %v1220, %v1221
        %v1223 = vrot.slane %v1118, 2
        %v1224 = vsel %vm640, %v1221, %v1223
        %v1225 = vrot.slane %v1119, 2
        %v1226 = vrot.slane %v1120, 2
        %v1227 = vsel %vm640, %v1225, %v1226
        %v1228 = vrot.slane %v1121, 2
        %v1229 = vsel %vm640, %v1226, %v1228
        %v1230 = vrot.slane %v1122, 2
        %v1231 = vrot.slane %v1123, 2
        %v1232 = vsel %vm640, %v1230, %v1231
        %v1233 = vrot.slane %v1124, 2
        %v1234 = vsel %vm640, %v1231, %v1233
        %v1235 = vrot.slane %v1125, 2
        %v1236 = vrot.slane %v1126, 2
        %v1237 = vsel %vm640, %v1235, %v1236
        %v1238 = vrot.slane %v1127, 2
        %v1239 = vsel %vm640, %v1236, %v1238
        %v1240 = vrot.slane %v1128, 2
        %v1241 = vrot.slane %v1129, 2
        %v1242 = vsel %vm640, %v1240, %v1241
        %v1243 = vrot.slane %v1130, 2
        %v1244 = vsel %vm640, %v1241, %v1243
        %v1245 = vrot.slane %v1131, 2
        %v1246 = vrot.slane %v1132, 2
        %v1247 = vsel %vm640, %v1245, %v1246
        %v1248 = vrot.slane %v1133, 2
        %v1249 = vsel %vm640, %v1246, %v1248
        %v1250 = vrot.slane %v1134, 2
        %v1251 = vrot.slane %v1135, 2
        %v1252 = vsel %vm640, %v1250, %v1251
        %v1253 = vrot.slane %v1136, 2
        %v1254 = vsel %vm640, %v1251, %v1253
        %v1255 = vrot.slane %v1137, 2
        %v1256 = vrot.slane %v1138, 2
        %v1257 = vsel %vm640, %v1255, %v1256
        %v1258 = vrot.slane %v1139, 2
        %v1259 = vsel %vm640, %v1256, %v1258
        %v1260 = vrot.slane %v1140, 2
        %v1261 = vrot.slane %v1141, 2
        %v1262 = vsel %vm640, %v1260, %v1261
        %v1263 = vrot.slane %v1142, 2
        %v1264 = vsel %vm640, %v1261, %v1263
        %v1265 = vrot.slane %v1143, 2
        %v1266 = vrot.slane %v1144, 2
        %v1267 = vsel %vm640, %v1265, %v1266
        %v1268 = vrot.slane %v1145, 2
        %v1269 = vsel %vm640, %v1266, %v1268
        %v1270 = vrot.slane %v1146, 2
        %v1271 = vrot.slane %v1147, 2
        %v1272 = vsel %vm640, %v1270, %v1271
        %v1273 = vrot.slane %v1148, 2
        %v1274 = vsel %vm640, %v1271, %v1273
        %v1275 = vrot.slane %v1149, 2
        %v1276 = vrot.slane %v1150, 2
        %v1277 = vsel %vm640, %v1275, %v1276
        %v1278 = vrot.slane %v1151, 2
        %v1279 = vsel %vm640, %v1276, %v1278
        %v1312 = vadd.f32 %v1067, %v1202
        %v1313 = vadd.f32 %v1068, %v1204
        %v1314 = vadd.f32 %v1069, %v1207
        %v1315 = vadd.f32 %v1070, %v1209
        %v1316 = vadd.f32 %v1071, %v1212
        %v1317 = vadd.f32 %v1072, %v1214
        %v1318 = vadd.f32 %v1073, %v1217
        %v1319 = vadd.f32 %v1074, %v1219
        %v1320 = vadd.f32 %v1075, %v1222
        %v1321 = vadd.f32 %v1076, %v1224
        %v1322 = vadd.f32 %v1077, %v1227
        %v1323 = vadd.f32 %v1078, %v1229
        %v1324 = vadd.f32 %v1079, %v1232
        %v1325 = vadd.f32 %v1080, %v1234
        %v1326 = vadd.f32 %v1081, %v1237
        %v1327 = vadd.f32 %v1082, %v1239
        %v1328 = vadd.f32 %v1083, %v1242
        %v1329 = vadd.f32 %v1084, %v1244
        %v1330 = vadd.f32 %v1085, %v1247
        %v1331 = vadd.f32 %v1086, %v1249
        %v1332 = vadd.f32 %v1087, %v1252
        %v1333 = vadd.f32 %v1088, %v1254
        %v1334 = vadd.f32 %v1089, %v1257
        %v1335 = vadd.f32 %v1090, %v1259
        %v1336 = vadd.f32 %v1091, %v1262
        %v1337 = vadd.f32 %v1092, %v1264
        %v1338 = vadd.f32 %v1093, %v1267
        %v1339 = vadd.f32 %v1094, %v1269
        %v1340 = vadd.f32 %v1095, %v1272
        %v1341 = vadd.f32 %v1096, %v1274
        %v1342 = vadd.f32 %v1097, %v1277
        %v1343 = vadd.f32 %v1098, %v1279
        %v1344 = vld [vmem:[%s1 + $0x6] sm:$0x1]
        %v1345 = vlaneseq
        %v1346 = vshrl.u32 %v1345, 7
        %v1347 = vsub.s32 0, %v1346
        %v1348 = vrot.slane %v1344, %v1347
        %v1349 = vmul.f32 %v176, %v1348
        %v1350 = vmul.f32 %v177, %v1348
        %v1351 = vmul.f32 %v179, %v1348
        %v1352 = vmul.f32 %v180, %v1348
        %v1353 = vmul.f32 %v182, %v1348
        %v1354 = vmul.f32 %v183, %v1348
        %v1355 = vmul.f32 %v185, %v1348
        %v1356 = vmul.f32 %v186, %v1348
        %v1357 = vmul.f32 %v188, %v1348
        %v1358 = vmul.f32 %v189, %v1348
        %v1359 = vmul.f32 %v191, %v1348
        %v1360 = vmul.f32 %v192, %v1348
        %v1361 = vmul.f32 %v194, %v1348
        %v1362 = vmul.f32 %v195, %v1348
        %v1363 = vmul.f32 %v197, %v1348
        %v1364 = vmul.f32 %v198, %v1348
        %v1365 = vmul.f32 %v200, %v1348
        %v1366 = vmul.f32 %v201, %v1348
        %v1367 = vmul.f32 %v203, %v1348
        %v1368 = vmul.f32 %v204, %v1348
        %v1369 = vmul.f32 %v206, %v1348
        %v1370 = vmul.f32 %v207, %v1348
        %v1371 = vmul.f32 %v209, %v1348
        %v1372 = vmul.f32 %v210, %v1348
        %v1373 = vmul.f32 %v212, %v1348
        %v1374 = vmul.f32 %v213, %v1348
        %v1375 = vmul.f32 %v215, %v1348
        %v1376 = vmul.f32 %v216, %v1348
        %v1377 = vmul.f32 %v218, %v1348
        %v1378 = vmul.f32 %v219, %v1348
        %v1379 = vmul.f32 %v221, %v1348
        %v1380 = vmul.f32 %v222, %v1348
        %v1381 = vadd.f32 %v1312, %v1349
        %v1382 = vadd.f32 %v1313, %v1350
        %v1383 = vadd.f32 %v1314, %v1351
        %v1384 = vadd.f32 %v1315, %v1352
        %v1385 = vadd.f32 %v1316, %v1353
        %v1386 = vadd.f32 %v1317, %v1354
        %v1387 = vadd.f32 %v1318, %v1355
        %v1388 = vadd.f32 %v1319, %v1356
        %v1389 = vadd.f32 %v1320, %v1357
        %v1390 = vadd.f32 %v1321, %v1358
        %v1391 = vadd.f32 %v1322, %v1359
        %v1392 = vadd.f32 %v1323, %v1360
        %v1393 = vadd.f32 %v1324, %v1361
        %v1394 = vadd.f32 %v1325, %v1362
        %v1395 = vadd.f32 %v1326, %v1363
        %v1396 = vadd.f32 %v1327, %v1364
        %v1397 = vadd.f32 %v1328, %v1365
        %v1398 = vadd.f32 %v1329, %v1366
        %v1399 = vadd.f32 %v1330, %v1367
        %v1400 = vadd.f32 %v1331, %v1368
        %v1401 = vadd.f32 %v1332, %v1369
        %v1402 = vadd.f32 %v1333, %v1370
        %v1403 = vadd.f32 %v1334, %v1371
        %v1404 = vadd.f32 %v1335, %v1372
        %v1405 = vadd.f32 %v1336, %v1373
        %v1406 = vadd.f32 %v1337, %v1374
        %v1407 = vadd.f32 %v1338, %v1375
        %v1408 = vadd.f32 %v1339, %v1376
        %v1409 = vadd.f32 %v1340, %v1377
        %v1410 = vadd.f32 %v1341, %v1378
        %v1411 = vadd.f32 %v1342, %v1379
        %v1412 = vadd.f32 %v1343, %v1380
        %v1413 = vld [vmem:[%s1 + $0x7] sm:$0x1]
        %v1414 = vlaneseq
        %v1415 = vshrl.u32 %v1414, 7
        %v1416 = vsub.s32 0, %v1415
        %v1417 = vrot.slane %v1413, %v1416
        %v1418 = vmul.f32 %v176, %v1417
        %v1419 = vmul.f32 %v177, %v1417
        %v1420 = vmul.f32 %v178, %v1417
        %v1421 = vmul.f32 %v179, %v1417
        %v1422 = vmul.f32 %v180, %v1417
        %v1423 = vmul.f32 %v181, %v1417
        %v1424 = vmul.f32 %v182, %v1417
        %v1425 = vmul.f32 %v183, %v1417
        %v1426 = vmul.f32 %v184, %v1417
        %v1427 = vmul.f32 %v185, %v1417
        %v1428 = vmul.f32 %v186, %v1417
        %v1429 = vmul.f32 %v187, %v1417
        %v1430 = vmul.f32 %v188, %v1417
        %v1431 = vmul.f32 %v189, %v1417
        %v1432 = vmul.f32 %v190, %v1417
        %v1433 = vmul.f32 %v191, %v1417
        %v1434 = vmul.f32 %v192, %v1417
        %v1435 = vmul.f32 %v193, %v1417
        %v1436 = vmul.f32 %v194, %v1417
        %v1437 = vmul.f32 %v195, %v1417
        %v1438 = vmul.f32 %v196, %v1417
        %v1439 = vmul.f32 %v197, %v1417
        %v1440 = vmul.f32 %v198, %v1417
        %v1441 = vmul.f32 %v199, %v1417
        %v1442 = vmul.f32 %v200, %v1417
        %v1443 = vmul.f32 %v201, %v1417
        %v1444 = vmul.f32 %v202, %v1417
        %v1445 = vmul.f32 %v203, %v1417
        %v1446 = vmul.f32 %v204, %v1417
        %v1447 = vmul.f32 %v205, %v1417
        %v1448 = vmul.f32 %v206, %v1417
        %v1449 = vmul.f32 %v207, %v1417
        %v1450 = vmul.f32 %v208, %v1417
        %v1451 = vmul.f32 %v209, %v1417
        %v1452 = vmul.f32 %v210, %v1417
        %v1453 = vmul.f32 %v211, %v1417
        %v1454 = vmul.f32 %v212, %v1417
        %v1455 = vmul.f32 %v213, %v1417
        %v1456 = vmul.f32 %v214, %v1417
        %v1457 = vmul.f32 %v215, %v1417
        %v1458 = vmul.f32 %v216, %v1417
        %v1459 = vmul.f32 %v217, %v1417
        %v1460 = vmul.f32 %v218, %v1417
        %v1461 = vmul.f32 %v219, %v1417
        %v1462 = vmul.f32 %v220, %v1417
        %v1463 = vmul.f32 %v221, %v1417
        %v1464 = vmul.f32 %v222, %v1417
        %v1465 = vmul.f32 %v223, %v1417
        %v1514 = vrot.slane %v1418, 1
        %v1515 = vrot.slane %v1419, 1
        %v1516 = vsel %vm394, %v1514, %v1515
        %v1517 = vrot.slane %v1420, 1
        %v1518 = vsel %vm394, %v1515, %v1517
        %v1519 = vrot.slane %v1421, 1
        %v1520 = vrot.slane %v1422, 1
        %v1521 = vsel %vm394, %v1519, %v1520
        %v1522 = vrot.slane %v1423, 1
        %v1523 = vsel %vm394, %v1520, %v1522
        %v1524 = vrot.slane %v1424, 1
        %v1525 = vrot.slane %v1425, 1
        %v1526 = vsel %vm394, %v1524, %v1525
        %v1527 = vrot.slane %v1426, 1
        %v1528 = vsel %vm394, %v1525, %v1527
        %v1529 = vrot.slane %v1427, 1
        %v1530 = vrot.slane %v1428, 1
        %v1531 = vsel %vm394, %v1529, %v1530
        %v1532 = vrot.slane %v1429, 1
        %v1533 = vsel %vm394, %v1530, %v1532
        %v1534 = vrot.slane %v1430, 1
        %v1535 = vrot.slane %v1431, 1
        %v1536 = vsel %vm394, %v1534, %v1535
        %v1537 = vrot.slane %v1432, 1
        %v1538 = vsel %vm394, %v1535, %v1537
        %v1539 = vrot.slane %v1433, 1
        %v1540 = vrot.slane %v1434, 1
        %v1541 = vsel %vm394, %v1539, %v1540
        %v1542 = vrot.slane %v1435, 1
        %v1543 = vsel %vm394, %v1540, %v1542
        %v1544 = vrot.slane %v1436, 1
        %v1545 = vrot.slane %v1437, 1
        %v1546 = vsel %vm394, %v1544, %v1545
        %v1547 = vrot.slane %v1438, 1
        %v1548 = vsel %vm394, %v1545, %v1547
        %v1549 = vrot.slane %v1439, 1
        %v1550 = vrot.slane %v1440, 1
        %v1551 = vsel %vm394, %v1549, %v1550
        %v1552 = vrot.slane %v1441, 1
        %v1553 = vsel %vm394, %v1550, %v1552
        %v1554 = vrot.slane %v1442, 1
        %v1555 = vrot.slane %v1443, 1
        %v1556 = vsel %vm394, %v1554, %v1555
        %v1557 = vrot.slane %v1444, 1
        %v1558 = vsel %vm394, %v1555, %v1557
        %v1559 = vrot.slane %v1445, 1
        %v1560 = vrot.slane %v1446, 1
        %v1561 = vsel %vm394, %v1559, %v1560
        %v1562 = vrot.slane %v1447, 1
        %v1563 = vsel %vm394, %v1560, %v1562
        %v1564 = vrot.slane %v1448, 1
        %v1565 = vrot.slane %v1449, 1
        %v1566 = vsel %vm394, %v1564, %v1565
        %v1567 = vrot.slane %v1450, 1
        %v1568 = vsel %vm394, %v1565, %v1567
        %v1569 = vrot.slane %v1451, 1
        %v1570 = vrot.slane %v1452, 1
        %v1571 = vsel %vm394, %v1569, %v1570
        %v1572 = vrot.slane %v1453, 1
        %v1573 = vsel %vm394, %v1570, %v1572
        %v1574 = vrot.slane %v1454, 1
        %v1575 = vrot.slane %v1455, 1
        %v1576 = vsel %vm394, %v1574, %v1575
        %v1577 = vrot.slane %v1456, 1
        %v1578 = vsel %vm394, %v1575, %v1577
        %v1579 = vrot.slane %v1457, 1
        %v1580 = vrot.slane %v1458, 1
        %v1581 = vsel %vm394, %v1579, %v1580
        %v1582 = vrot.slane %v1459, 1
        %v1583 = vsel %vm394, %v1580, %v1582
        %v1584 = vrot.slane %v1460, 1
        %v1585 = vrot.slane %v1461, 1
        %v1586 = vsel %vm394, %v1584, %v1585
        %v1587 = vrot.slane %v1462, 1
        %v1588 = vsel %vm394, %v1585, %v1587
        %v1589 = vrot.slane %v1463, 1
        %v1590 = vrot.slane %v1464, 1
        %v1591 = vsel %vm394, %v1589, %v1590
        %v1592 = vrot.slane %v1465, 1
        %v1593 = vsel %vm394, %v1590, %v1592
        %v1626 = vadd.f32 %v1381, %v1516
        %v1627 = vadd.f32 %v1382, %v1518
        %v1628 = vadd.f32 %v1383, %v1521
        %v1629 = vadd.f32 %v1384, %v1523
        %v1630 = vadd.f32 %v1385, %v1526
        %v1631 = vadd.f32 %v1386, %v1528
        %v1632 = vadd.f32 %v1387, %v1531
        %v1633 = vadd.f32 %v1388, %v1533
        %v1634 = vadd.f32 %v1389, %v1536
        %v1635 = vadd.f32 %v1390, %v1538
        %v1636 = vadd.f32 %v1391, %v1541
        %v1637 = vadd.f32 %v1392, %v1543
        %v1638 = vadd.f32 %v1393, %v1546
        %v1639 = vadd.f32 %v1394, %v1548
        %v1640 = vadd.f32 %v1395, %v1551
        %v1641 = vadd.f32 %v1396, %v1553
        %v1642 = vadd.f32 %v1397, %v1556
        %v1643 = vadd.f32 %v1398, %v1558
        %v1644 = vadd.f32 %v1399, %v1561
        %v1645 = vadd.f32 %v1400, %v1563
        %v1646 = vadd.f32 %v1401, %v1566
        %v1647 = vadd.f32 %v1402, %v1568
        %v1648 = vadd.f32 %v1403, %v1571
        %v1649 = vadd.f32 %v1404, %v1573
        %v1650 = vadd.f32 %v1405, %v1576
        %v1651 = vadd.f32 %v1406, %v1578
        %v1652 = vadd.f32 %v1407, %v1581
        %v1653 = vadd.f32 %v1408, %v1583
        %v1654 = vadd.f32 %v1409, %v1586
        %v1655 = vadd.f32 %v1410, %v1588
        %v1656 = vadd.f32 %v1411, %v1591
        %v1657 = vadd.f32 %v1412, %v1593
        %v1658 = vld [vmem:[%s1 + $0x8] sm:$0x1]
        %v1659 = vlaneseq
        %v1660 = vshrl.u32 %v1659, 7
        %v1661 = vsub.s32 0, %v1660
        %v1662 = vrot.slane %v1658, %v1661
        %v1663 = vmul.f32 %v176, %v1662
        %v1664 = vmul.f32 %v177, %v1662
        %v1665 = vmul.f32 %v178, %v1662
        %v1666 = vmul.f32 %v179, %v1662
        %v1667 = vmul.f32 %v180, %v1662
        %v1668 = vmul.f32 %v181, %v1662
        %v1669 = vmul.f32 %v182, %v1662
        %v1670 = vmul.f32 %v183, %v1662
        %v1671 = vmul.f32 %v184, %v1662
        %v1672 = vmul.f32 %v185, %v1662
        %v1673 = vmul.f32 %v186, %v1662
        %v1674 = vmul.f32 %v187, %v1662
        %v1675 = vmul.f32 %v188, %v1662
        %v1676 = vmul.f32 %v189, %v1662
        %v1677 = vmul.f32 %v190, %v1662
        %v1678 = vmul.f32 %v191, %v1662
        %v1679 = vmul.f32 %v192, %v1662
        %v1680 = vmul.f32 %v193, %v1662
        %v1681 = vmul.f32 %v194, %v1662
        %v1682 = vmul.f32 %v195, %v1662
        %v1683 = vmul.f32 %v196, %v1662
        %v1684 = vmul.f32 %v197, %v1662
        %v1685 = vmul.f32 %v198, %v1662
        %v1686 = vmul.f32 %v199, %v1662
        %v1687 = vmul.f32 %v200, %v1662
        %v1688 = vmul.f32 %v201, %v1662
        %v1689 = vmul.f32 %v202, %v1662
        %v1690 = vmul.f32 %v203, %v1662
        %v1691 = vmul.f32 %v204, %v1662
        %v1692 = vmul.f32 %v205, %v1662
        %v1693 = vmul.f32 %v206, %v1662
        %v1694 = vmul.f32 %v207, %v1662
        %v1695 = vmul.f32 %v208, %v1662
        %v1696 = vmul.f32 %v209, %v1662
        %v1697 = vmul.f32 %v210, %v1662
        %v1698 = vmul.f32 %v211, %v1662
        %v1699 = vmul.f32 %v212, %v1662
        %v1700 = vmul.f32 %v213, %v1662
        %v1701 = vmul.f32 %v214, %v1662
        %v1702 = vmul.f32 %v215, %v1662
        %v1703 = vmul.f32 %v216, %v1662
        %v1704 = vmul.f32 %v217, %v1662
        %v1705 = vmul.f32 %v218, %v1662
        %v1706 = vmul.f32 %v219, %v1662
        %v1707 = vmul.f32 %v220, %v1662
        %v1708 = vmul.f32 %v221, %v1662
        %v1709 = vmul.f32 %v222, %v1662
        %v1710 = vmul.f32 %v223, %v1662
        %v1759 = vrot.slane %v1663, 2
        %v1760 = vrot.slane %v1664, 2
        %v1761 = vsel %vm640, %v1759, %v1760
        %v1762 = vrot.slane %v1665, 2
        %v1763 = vsel %vm640, %v1760, %v1762
        %v1764 = vrot.slane %v1666, 2
        %v1765 = vrot.slane %v1667, 2
        %v1766 = vsel %vm640, %v1764, %v1765
        %v1767 = vrot.slane %v1668, 2
        %v1768 = vsel %vm640, %v1765, %v1767
        %v1769 = vrot.slane %v1669, 2
        %v1770 = vrot.slane %v1670, 2
        %v1771 = vsel %vm640, %v1769, %v1770
        %v1772 = vrot.slane %v1671, 2
        %v1773 = vsel %vm640, %v1770, %v1772
        %v1774 = vrot.slane %v1672, 2
        %v1775 = vrot.slane %v1673, 2
        %v1776 = vsel %vm640, %v1774, %v1775
        %v1777 = vrot.slane %v1674, 2
        %v1778 = vsel %vm640, %v1775, %v1777
        %v1779 = vrot.slane %v1675, 2
        %v1780 = vrot.slane %v1676, 2
        %v1781 = vsel %vm640, %v1779, %v1780
        %v1782 = vrot.slane %v1677, 2
        %v1783 = vsel %vm640, %v1780, %v1782
        %v1784 = vrot.slane %v1678, 2
        %v1785 = vrot.slane %v1679, 2
        %v1786 = vsel %vm640, %v1784, %v1785
        %v1787 = vrot.slane %v1680, 2
        %v1788 = vsel %vm640, %v1785, %v1787
        %v1789 = vrot.slane %v1681, 2
        %v1790 = vrot.slane %v1682, 2
        %v1791 = vsel %vm640, %v1789, %v1790
        %v1792 = vrot.slane %v1683, 2
        %v1793 = vsel %vm640, %v1790, %v1792
        %v1794 = vrot.slane %v1684, 2
        %v1795 = vrot.slane %v1685, 2
        %v1796 = vsel %vm640, %v1794, %v1795
        %v1797 = vrot.slane %v1686, 2
        %v1798 = vsel %vm640, %v1795, %v1797
        %v1799 = vrot.slane %v1687, 2
        %v1800 = vrot.slane %v1688, 2
        %v1801 = vsel %vm640, %v1799, %v1800
        %v1802 = vrot.slane %v1689, 2
        %v1803 = vsel %vm640, %v1800, %v1802
        %v1804 = vrot.slane %v1690, 2
        %v1805 = vrot.slane %v1691, 2
        %v1806 = vsel %vm640, %v1804, %v1805
        %v1807 = vrot.slane %v1692, 2
        %v1808 = vsel %vm640, %v1805, %v1807
        %v1809 = vrot.slane %v1693, 2
        %v1810 = vrot.slane %v1694, 2
        %v1811 = vsel %vm640, %v1809, %v1810
        %v1812 = vrot.slane %v1695, 2
        %v1813 = vsel %vm640, %v1810, %v1812
        %v1814 = vrot.slane %v1696, 2
        %v1815 = vrot.slane %v1697, 2
        %v1816 = vsel %vm640, %v1814, %v1815
        %v1817 = vrot.slane %v1698, 2
        %v1818 = vsel %vm640, %v1815, %v1817
        %v1819 = vrot.slane %v1699, 2
        %v1820 = vrot.slane %v1700, 2
        %v1821 = vsel %vm640, %v1819, %v1820
        %v1822 = vrot.slane %v1701, 2
        %v1823 = vsel %vm640, %v1820, %v1822
        %v1824 = vrot.slane %v1702, 2
        %v1825 = vrot.slane %v1703, 2
        %v1826 = vsel %vm640, %v1824, %v1825
        %v1827 = vrot.slane %v1704, 2
        %v1828 = vsel %vm640, %v1825, %v1827
        %v1829 = vrot.slane %v1705, 2
        %v1830 = vrot.slane %v1706, 2
        %v1831 = vsel %vm640, %v1829, %v1830
        %v1832 = vrot.slane %v1707, 2
        %v1833 = vsel %vm640, %v1830, %v1832
        %v1834 = vrot.slane %v1708, 2
        %v1835 = vrot.slane %v1709, 2
        %v1836 = vsel %vm640, %v1834, %v1835
        %v1837 = vrot.slane %v1710, 2
        %v1838 = vsel %vm640, %v1835, %v1837
        %v1871 = vadd.f32 %v1626, %v1761
        %v1872 = vadd.f32 %v1627, %v1763
        %v1873 = vadd.f32 %v1628, %v1766
        %v1874 = vadd.f32 %v1629, %v1768
        %v1875 = vadd.f32 %v1630, %v1771
        %v1876 = vadd.f32 %v1631, %v1773
        %v1877 = vadd.f32 %v1632, %v1776
        %v1878 = vadd.f32 %v1633, %v1778
        %v1879 = vadd.f32 %v1634, %v1781
        %v1880 = vadd.f32 %v1635, %v1783
        %v1881 = vadd.f32 %v1636, %v1786
        %v1882 = vadd.f32 %v1637, %v1788
        %v1883 = vadd.f32 %v1638, %v1791
        %v1884 = vadd.f32 %v1639, %v1793
        %v1885 = vadd.f32 %v1640, %v1796
        %v1886 = vadd.f32 %v1641, %v1798
        %v1887 = vadd.f32 %v1642, %v1801
        %v1888 = vadd.f32 %v1643, %v1803
        %v1889 = vadd.f32 %v1644, %v1806
        %v1890 = vadd.f32 %v1645, %v1808
        %v1891 = vadd.f32 %v1646, %v1811
        %v1892 = vadd.f32 %v1647, %v1813
        %v1893 = vadd.f32 %v1648, %v1816
        %v1894 = vadd.f32 %v1649, %v1818
        %v1895 = vadd.f32 %v1650, %v1821
        %v1896 = vadd.f32 %v1651, %v1823
        %v1897 = vadd.f32 %v1652, %v1826
        %v1898 = vadd.f32 %v1653, %v1828
        %v1899 = vadd.f32 %v1654, %v1831
        %v1900 = vadd.f32 %v1655, %v1833
        %v1901 = vadd.f32 %v1656, %v1836
        %v1902 = vadd.f32 %v1657, %v1838
        %v1903 = vpack.c.bf16 %v1872, %v1871
        %v1904 = vpack.c.bf16 %v1874, %v1873
        %v1905 = vpack.c.bf16 %v1876, %v1875
        %v1906 = vpack.c.bf16 %v1878, %v1877
        %v1907 = vpack.c.bf16 %v1880, %v1879
        %v1908 = vpack.c.bf16 %v1882, %v1881
        %v1909 = vpack.c.bf16 %v1884, %v1883
        %v1910 = vpack.c.bf16 %v1886, %v1885
        %v1911 = vpack.c.bf16 %v1888, %v1887
        %v1912 = vpack.c.bf16 %v1890, %v1889
        %v1913 = vpack.c.bf16 %v1892, %v1891
        %v1914 = vpack.c.bf16 %v1894, %v1893
        %v1915 = vpack.c.bf16 %v1896, %v1895
        %v1916 = vpack.c.bf16 %v1898, %v1897
        %v1917 = vpack.c.bf16 %v1900, %v1899
        %v1918 = vpack.c.bf16 %v1902, %v1901
        %v1919 = vld [vmem:[%s2] sm:$0xf]
        %v1920 = vld [vmem:[%s2 + $0x4] sm:$0xf]
        %v1921 = vld [vmem:[%s2 + $0x8] sm:$0xf]
        %v1922 = vld [vmem:[%s2 + $0xc] sm:$0xf]
        %v1927 = vunpack.c.l.b16 %v1919
        %v1928 = vunpack.c.l.b16 %v1920
        %v1929 = vunpack.c.l.b16 %v1921
        %v1930 = vunpack.c.l.b16 %v1922
        %v1931 = vpack.c.b16 %v1928, %v1927
        %v1932 = vpack.c.b16 %v1930, %v1929
        %vm1935 = vcmask 261120
        %v1937 = vsel %vm1935, %v1903, 0
        %v1940 = vsel %vm1935, %v1904, 0
        %v1943 = vsel %vm1935, %v1905, 0
        %v1946 = vsel %vm1935, %v1906, 0
        %v1949 = vsel %vm1935, %v1907, 0
        %v1952 = vsel %vm1935, %v1908, 0
        %v1955 = vsel %vm1935, %v1909, 0
        %v1958 = vsel %vm1935, %v1910, 0
        %v1961 = vsel %vm1935, %v1911, 0
        %v1964 = vsel %vm1935, %v1912, 0
        %v1967 = vsel %vm1935, %v1913, 0
        %v1970 = vsel %vm1935, %v1914, 0
        %v1973 = vsel %vm1935, %v1915, 0
        %v1976 = vsel %vm1935, %v1916, 0
        %v1979 = vsel %vm1935, %v1917, 0
        %v1982 = vsel %vm1935, %v1918, 0
        %1984 = vmatprep.subr.bf16.mxu0 0
        %1985 = vmatpush1.bf16.msra.mxu0 %v1931
        %1986 = vmatprep.subr.bf16.mxu0 0
        %1987 = vmatpush1.bf16.msra.mxu0 %v1932
        %1988 = vmatprep.subr.bf16.mxu0 0
        %1989 = vmatpush1.bf16.msra.mxu0 0
        %1990 = vmatprep.subr.bf16.mxu0 0
        %1991 = vmatpush1.bf16.msra.mxu0 0
        %1992 = vmatprep.subr.bf16.mxu0 0
        %1993 = vmatpush1.bf16.msra.mxu0 0
        %1994 = vmatprep.subr.bf16.mxu0 0
        %1995 = vmatpush1.bf16.msra.mxu0 0
        %1996 = vmatprep.subr.bf16.mxu0 0
        %1997 = vmatpush1.bf16.msra.mxu0 0
        %1998 = vmatprep.subr.bf16.mxu0 0
        %1999 = vmatpush1.bf16.msra.mxu0 0
        %2000 = vmatprep.subr.bf16.mxu0 0
        %2001 = vmatpush1.bf16.msra.mxu0 0
        %2002 = vmatprep.subr.bf16.mxu0 0
        %2003 = vmatpush1.bf16.msra.mxu0 0
        %2004 = vmatprep.subr.bf16.mxu0 0
        %2005 = vmatpush1.bf16.msra.mxu0 0
        %2006 = vmatprep.subr.bf16.mxu0 0
        %2007 = vmatpush1.bf16.msra.mxu0 0
        %2008 = vmatprep.subr.bf16.mxu0 0
        %2009 = vmatpush1.bf16.msra.mxu0 0
        %2010 = vmatprep.subr.bf16.mxu0 0
        %2011 = vmatpush1.bf16.msra.mxu0 0
        %2012 = vmatprep.subr.bf16.mxu0 0
        %2013 = vmatpush1.bf16.msra.mxu0 0
        %2014 = vmatprep.subr.bf16.mxu0 0
        %2015 = vmatpush1.bf16.msra.mxu0 0
        %2016 = vmatprep.mubr.bf16.mxu0 0
        %2017 = vmatmul.mubr.bf16.gmra.mrb[0].mxu0 %v1937
        %v2018 = vpop.f32.mrb[0].mxu0
        %v2019 = vadd.f32 0.0, %v2018
        %v2020 = vpop.f32.mrb[0].mxu0
        %v2021 = vpop.f32.mrb[0].mxu0
        %v2022 = vadd.f32 0.0, %v2021
        %v2023 = vpop.f32.mrb[0].mxu0
        %2024 = vmatprep.mubr.bf16.mxu0 0
        %2025 = vmatmul.mubr.bf16.gmra.mrb[0].mxu0 %v1940
        %v2026 = vpop.f32.mrb[0].mxu0
        %v2027 = vadd.f32 0.0, %v2026
        %v2028 = vpop.f32.mrb[0].mxu0
        %v2029 = vpop.f32.mrb[0].mxu0
        %v2030 = vadd.f32 0.0, %v2029
        %v2031 = vpop.f32.mrb[0].mxu0
        %2032 = vmatprep.mubr.bf16.mxu0 0
        %2033 = vmatmul.mubr.bf16.gmra.mrb[0].mxu0 %v1943
        %v2034 = vpop.f32.mrb[0].mxu0
        %v2035 = vadd.f32 0.0, %v2034
        %v2036 = vpop.f32.mrb[0].mxu0
        %v2037 = vpop.f32.mrb[0].mxu0
        %v2038 = vadd.f32 0.0, %v2037
        %v2039 = vpop.f32.mrb[0].mxu0
        %2040 = vmatprep.mubr.bf16.mxu0 0
        %2041 = vmatmul.mubr.bf16.gmra.mrb[0].mxu0 %v1946
        %v2042 = vpop.f32.mrb[0].mxu0
        %v2043 = vadd.f32 0.0, %v2042
        %v2044 = vpop.f32.mrb[0].mxu0
        %v2045 = vpop.f32.mrb[0].mxu0
        %v2046 = vadd.f32 0.0, %v2045
        %v2047 = vpop.f32.mrb[0].mxu0
        %2048 = vmatprep.mubr.bf16.mxu0 0
        %2049 = vmatmul.mubr.bf16.gmra.mrb[0].mxu0 %v1949
        %v2050 = vpop.f32.mrb[0].mxu0
        %v2051 = vadd.f32 0.0, %v2050
        %v2052 = vpop.f32.mrb[0].mxu0
        %v2053 = vpop.f32.mrb[0].mxu0
        %v2054 = vadd.f32 0.0, %v2053
        %v2055 = vpop.f32.mrb[0].mxu0
        %2056 = vmatprep.mubr.bf16.mxu0 0
        %2057 = vmatmul.mubr.bf16.gmra.mrb[0].mxu0 %v1952
        %v2058 = vpop.f32.mrb[0].mxu0
        %v2059 = vadd.f32 0.0, %v2058
        %v2060 = vpop.f32.mrb[0].mxu0
        %v2061 = vpop.f32.mrb[0].mxu0
        %v2062 = vadd.f32 0.0, %v2061
        %v2063 = vpop.f32.mrb[0].mxu0
        %2064 = vmatprep.mubr.bf16.mxu0 0
        %2065 = vmatmul.mubr.bf16.gmra.mrb[0].mxu0 %v1955
        %v2066 = vpop.f32.mrb[0].mxu0
        %v2067 = vadd.f32 0.0, %v2066
        %v2068 = vpop.f32.mrb[0].mxu0
        %v2069 = vpop.f32.mrb[0].mxu0
        %v2070 = vadd.f32 0.0, %v2069
        %v2071 = vpop.f32.mrb[0].mxu0
        %2072 = vmatprep.mubr.bf16.mxu0 0
        %2073 = vmatmul.mubr.bf16.gmra.mrb[0].mxu0 %v1958
        %v2074 = vpop.f32.mrb[0].mxu0
        %v2075 = vadd.f32 0.0, %v2074
        %v2076 = vpop.f32.mrb[0].mxu0
        %v2077 = vpop.f32.mrb[0].mxu0
        %v2078 = vadd.f32 0.0, %v2077
        %v2079 = vpop.f32.mrb[0].mxu0
        %2080 = vmatprep.mubr.bf16.mxu0 0
        %2081 = vmatmul.mubr.bf16.gmra.mrb[0].mxu0 %v1961
        %v2082 = vpop.f32.mrb[0].mxu0
        %v2083 = vadd.f32 0.0, %v2082
        %v2084 = vpop.f32.mrb[0].mxu0
        %v2085 = vpop.f32.mrb[0].mxu0
        %v2086 = vadd.f32 0.0, %v2085
        %v2087 = vpop.f32.mrb[0].mxu0
        %2088 = vmatprep.mubr.bf16.mxu0 0
        %2089 = vmatmul.mubr.bf16.gmra.mrb[0].mxu0 %v1964
        %v2090 = vpop.f32.mrb[0].mxu0
        %v2091 = vadd.f32 0.0, %v2090
        %v2092 = vpop.f32.mrb[0].mxu0
        %v2093 = vpop.f32.mrb[0].mxu0
        %v2094 = vadd.f32 0.0, %v2093
        %v2095 = vpop.f32.mrb[0].mxu0
        %2096 = vmatprep.mubr.bf16.mxu0 0
        %2097 = vmatmul.mubr.bf16.gmra.mrb[0].mxu0 %v1967
        %v2098 = vpop.f32.mrb[0].mxu0
        %v2099 = vadd.f32 0.0, %v2098
        %v2100 = vpop.f32.mrb[0].mxu0
        %v2101 = vpop.f32.mrb[0].mxu0
        %v2102 = vadd.f32 0.0, %v2101
        %v2103 = vpop.f32.mrb[0].mxu0
        %2104 = vmatprep.mubr.bf16.mxu0 0
        %2105 = vmatmul.mubr.bf16.gmra.mrb[0].mxu0 %v1970
        %v2106 = vpop.f32.mrb[0].mxu0
        %v2107 = vadd.f32 0.0, %v2106
        %v2108 = vpop.f32.mrb[0].mxu0
        %v2109 = vpop.f32.mrb[0].mxu0
        %v2110 = vadd.f32 0.0, %v2109
        %v2111 = vpop.f32.mrb[0].mxu0
        %2112 = vmatprep.mubr.bf16.mxu0 0
        %2113 = vmatmul.mubr.bf16.gmra.mrb[0].mxu0 %v1973
        %v2114 = vpop.f32.mrb[0].mxu0
        %v2115 = vadd.f32 0.0, %v2114
        %v2116 = vpop.f32.mrb[0].mxu0
        %v2117 = vpop.f32.mrb[0].mxu0
        %v2118 = vadd.f32 0.0, %v2117
        %v2119 = vpop.f32.mrb[0].mxu0
        %2120 = vmatprep.mubr.bf16.mxu0 0
        %2121 = vmatmul.mubr.bf16.gmra.mrb[0].mxu0 %v1976
        %v2122 = vpop.f32.mrb[0].mxu0
        %v2123 = vadd.f32 0.0, %v2122
        %v2124 = vpop.f32.mrb[0].mxu0
        %v2125 = vpop.f32.mrb[0].mxu0
        %v2126 = vadd.f32 0.0, %v2125
        %v2127 = vpop.f32.mrb[0].mxu0
        %2128 = vmatprep.mubr.bf16.mxu0 0
        %2129 = vmatmul.mubr.bf16.gmra.mrb[0].mxu0 %v1979
        %v2130 = vpop.f32.mrb[0].mxu0
        %v2131 = vadd.f32 0.0, %v2130
        %v2132 = vpop.f32.mrb[0].mxu0
        %v2133 = vpop.f32.mrb[0].mxu0
        %v2134 = vadd.f32 0.0, %v2133
        %v2135 = vpop.f32.mrb[0].mxu0
        %2136 = vmatprep.mubr.bf16.mxu0 0
        %2137 = vmatmul.mubr.bf16.gmra.mrb[0].mxu0 %v1982
        %v2138 = vpop.f32.mrb[0].mxu0
        %v2139 = vadd.f32 0.0, %v2138
        %v2140 = vpop.f32.mrb[0].mxu0
        %v2141 = vpop.f32.mrb[0].mxu0
        %v2142 = vadd.f32 0.0, %v2141
        %v2143 = vpop.f32.mrb[0].mxu0
        %2144 = vdwg.mxu0
        %vm2145 = vcmask 523264
        %2146 = vst.msk [vmem:[%s163] sm:$0xff] %vm2145, %v2019
        %2147 = vst.msk [vmem:[%s163 + $0x8] sm:$0xff] %vm2145, %v2022
        %2148 = vst.msk [vmem:[%s163 + $0x10] sm:$0xff] %vm2145, %v2027
        %2149 = vst.msk [vmem:[%s163 + $0x18] sm:$0xff] %vm2145, %v2030
        %2150 = vst.msk [vmem:[%s163 + $0x20] sm:$0xff] %vm2145, %v2035
        %2151 = vst.msk [vmem:[%s163 + $0x28] sm:$0xff] %vm2145, %v2038
        %2152 = vst.msk [vmem:[%s163 + $0x30] sm:$0xff] %vm2145, %v2043
        %2153 = vst.msk [vmem:[%s163 + $0x38] sm:$0xff] %vm2145, %v2046
        %2154 = vst.msk [vmem:[%s163 + $0x40] sm:$0xff] %vm2145, %v2051
        %2155 = vst.msk [vmem:[%s163 + $0x48] sm:$0xff] %vm2145, %v2054
        %2156 = vst.msk [vmem:[%s163 + $0x50] sm:$0xff] %vm2145, %v2059
        %2157 = vst.msk [vmem:[%s163 + $0x58] sm:$0xff] %vm2145, %v2062
        %2158 = vst.msk [vmem:[%s163 + $0x60] sm:$0xff] %vm2145, %v2067
        %2159 = vst.msk [vmem:[%s163 + $0x68] sm:$0xff] %vm2145, %v2070
        %2160 = vst.msk [vmem:[%s163 + $0x70] sm:$0xff] %vm2145, %v2075
        %2161 = vst.msk [vmem:[%s163 + $0x78] sm:$0xff] %vm2145, %v2078
        %2162 = vst.msk [vmem:[%s163 + $0x80] sm:$0xff] %vm2145, %v2083
        %2163 = vst.msk [vmem:[%s163 + $0x88] sm:$0xff] %vm2145, %v2086
        %2164 = vst.msk [vmem:[%s163 + $0x90] sm:$0xff] %vm2145, %v2091
        %2165 = vst.msk [vmem:[%s163 + $0x98] sm:$0xff] %vm2145, %v2094
        %2166 = vst.msk [vmem:[%s163 + $0xa0] sm:$0xff] %vm2145, %v2099
        %2167 = vst.msk [vmem:[%s163 + $0xa8] sm:$0xff] %vm2145, %v2102
        %2168 = vst.msk [vmem:[%s163 + $0xb0] sm:$0xff] %vm2145, %v2107
        %2169 = vst.msk [vmem:[%s163 + $0xb8] sm:$0xff] %vm2145, %v2110
        %2170 = vst.msk [vmem:[%s163 + $0xc0] sm:$0xff] %vm2145, %v2115
        %2171 = vst.msk [vmem:[%s163 + $0xc8] sm:$0xff] %vm2145, %v2118
        %2172 = vst.msk [vmem:[%s163 + $0xd0] sm:$0xff] %vm2145, %v2123
        %2173 = vst.msk [vmem:[%s163 + $0xd8] sm:$0xff] %vm2145, %v2126
        %2174 = vst.msk [vmem:[%s163 + $0xe0] sm:$0xff] %vm2145, %v2131
        %2175 = vst.msk [vmem:[%s163 + $0xe8] sm:$0xff] %vm2145, %v2134
        %2176 = vst.msk [vmem:[%s163 + $0xf0] sm:$0xff] %vm2145, %v2139
        %2177 = vst.msk [vmem:[%s163 + $0xf8] sm:$0xff] %vm2145, %v2142
        %s2178 = sand.u32 %s93, 1
        %s2179 = scalar_lea.sflag [#allocation3], %s2178
        %s2180 = sand.u32 %s93, 1
        %s2181 = smul.addr %s2180, 256
        %s2182 = scalar_lea.vmem [#allocation2], %s2181
        // Predicated region
        $region33: #{separable_conv2d.1} parent=31 // pred_check
          %p2183 = pneg %p103
        $region34: #{separable_conv2d.1} parent=31 // pred_check_branch
          %2185 = sbr.rel (%p2183) target = $region36
        $region35: #{separable_conv2d.1} parent=31 // pred_region
          %s2187 = ssub.s32 4096, 4096
          %2188 = vsyncadd %s2179, %s2187
          %s2189 = smul.addr %s17, 32
          %s2190 = smul.addr %s2189, 128
          %s2191 = scalar_lea.hbm %s3, %s2190
          %s2192 = sshll.u32 %s2182, 4
          %s2193 = int_to_ptr.vmem [resolvable:$true] %s2192
          %2198 = dma.vmem_to_hbm [thread:$0]  %s2193, 4096, %s2191, %s2179, 128, 128, 8
        $region36: #{separable_conv2d.1} parent=31 // pred_fallthru
          _
      $region32: #{separable_conv2d.1} parent=5 // pred_fallthru
        _
      %p2199 = scmp.le.s32.totalorder 2, %s12
      // Predicated region
      $region37: #{separable_conv2d.1} parent=5 // pred_check
        %p2200 = pneg %p2199
      $region38: #{separable_conv2d.1} parent=5 // pred_check_branch
        %2202 = sbr.rel (%p2200) target = $region40
      $region39: #{separable_conv2d.1} parent=5 // pred_region
        %s2203 = ssub.s32 %s12, 2
        // Predicated region
        $region41: #{separable_conv2d.1} parent=39 // pred_check
          %p2204 = pneg %p109
        $region42: #{separable_conv2d.1} parent=39 // pred_check_branch
          %2206 = sbr.rel (%p2204) target = $region44
        $region43: #{separable_conv2d.1} parent=39 // pred_region
          %s2207 = sand.u32 %s94, 1
          %s2208 = scalar_lea.sflag [#allocation3], %s2207
          %s2209 = sand.u32 %s94, 1
          %s2210 = smul.addr %s2209, 256
          %s2211 = scalar_lea.vmem [#allocation2], %s2210
          %2212 = dma.done %s2208, 4096
        $region44: #{separable_conv2d.1} parent=39 // pred_fallthru
          _
      $region40: #{separable_conv2d.1} parent=5 // pred_fallthru
        _
    $region6: #{separable_conv2d.1} parent=1 // loop_footer
      %s16 = sadd.s32 1, %s12
    $region7: #{separable_conv2d.1} parent=1 // loop_footer_branch
      %11 = sbr.rel target = $region3
    $region8: #{separable_conv2d.1} parent=1 // loop_exit
      _
    %2213 = vsyncpa [#allocation3], 1
    %s2214 = scalar_lea.sflag [#allocation3], 1
    %2215 = vsyncpa %s2214, 1

</llo_original>
